<compile_context>
chip_gen: v6e
topology: v6e:2x2x1
jax: 0.10.0
libtpu: 0.0.40
codegen_flags: <defaults>
</compile_context>

<pallas_src>
import jax
import jax.numpy as jnp
from jax.experimental import pallas as pl
from jax.experimental.pallas import tpu as pltpu


# --------------------------------------------------------------------------- #
# Kernel
# --------------------------------------------------------------------------- #
def _make_cnp_kernel(bb, nt, dy, with_loss, mm_dtype):
    """bb = fused batches per grid step, nt = target points per batch."""

    def kernel(*refs):
        if with_loss:
            (fc_ref, tx_ref, ty_ref, avg_ref, expand_ref,
             we1_ref, be1_ref, we2_ref, be2_ref,
             wd1x_ref, wd1r_ref, bd1_ref, wd2_ref, bd2_ref,
             probs_ref, ce_ref) = refs
        else:
            (fc_ref, tx_ref, avg_ref, expand_ref,
             we1_ref, be1_ref, we2_ref, be2_ref,
             wd1x_ref, wd1r_ref, bd1_ref, wd2_ref, bd2_ref,
             probs_ref) = refs
            ty_ref = ce_ref = None

        def mm(a, b):
            # bf16 MXU operands only when dims are large enough (gated in wrapper);
            # accumulation stays f32.
            return jnp.dot(a.astype(mm_dtype), b.astype(mm_dtype),
                           preferred_element_type=jnp.float32)

        # ---- Encoder MLP on pre-concatenated (context_x | context_y) rows ----
        h = jnp.maximum(mm(fc_ref[...], we1_ref[...]) + be1_ref[...], 0.0)   # (bb*Nc, H)
        enc = mm(h, we2_ref[...]) + be2_ref[...]                             # (bb*Nc, dr)

        # ---- Per-batch mean over context points: hoisted block-diag matmul ----
        r = jnp.dot(avg_ref[...], enc, preferred_element_type=jnp.float32)  # (bb, dr)

        # ---- Decoder layer 1: concat(tx, tile(r)) @ Wd1 == tx@Wd1x + expand@(r@Wd1r + bd1)
        rproj = mm(r, wd1r_ref[...]) + bd1_ref[...]                          # (bb, H2) bias folded
        h2 = mm(tx_ref[...], wd1x_ref[...])                                  # (bb*Nt, H2)
        h2 = h2 + jnp.dot(expand_ref[...], rproj, preferred_element_type=jnp.float32)
        h2 = jnp.maximum(h2, 0.0)

        logits = mm(h2, wd2_ref[...]) + bd2_ref[...]                         # (bb*Nt, dy)

        # ---- Softmax over the class dim (full-precision reciprocal: 1e-5 parity) ----
        m = jnp.max(logits, axis=-1, keepdims=True)
        e = jnp.exp(logits - m)
        denom = jnp.sum(e, axis=-1, keepdims=True)
        p = e * pl.reciprocal(denom, approx=False)                           # (bb*Nt, dy)

        # ---- Lane-dense repack of the output block ----
        # Rows are ordered (target j, batch b), so rows j*bb:(j+1)*bb are the bb
        # batches of target point j; they go to lanes j*dy:(j+1)*dy of the block.
        for j in range(nt):
            probs_ref[:, j * dy:(j + 1) * dy] = p[j * bb:(j + 1) * bb, :]

        if with_loss:
            # One scalar CE sum per grid step; wrapper divides by B*Nt (== torch.mean).
            ce_ref[...] = -jnp.sum(ty_ref[...] * jnp.log(p + 1e-6), keepdims=True)

    return kernel


# --------------------------------------------------------------------------- #
# Wrapper
# --------------------------------------------------------------------------- #
def _tensorcores_per_chip():
    try:
        kind = jax.devices()[0].device_kind.lower()
    except Exception:
        return 1
    return 2 if ("v7" in kind or "tpu7" in kind) else 1


def _pick_block_batch(B, Nc, Nt, *, max_rows=2048, min_steps=1):
    """Largest bb with (8,128)-safe blocks, rows <= max_rows and B//bb >= min_steps."""
    legal = [c for c in range(1, B + 1) if B % c == 0 and (c == B or c % 8 == 0)]
    capped = [c for c in legal if c * max(Nc, Nt) <= max_rows] or legal
    stepped = [c for c in capped if B // c >= min_steps] or capped
    return max(stepped)


def cnp_forward(context_x, context_y, target_x, params, target_y=None, *,
                block_batch=None, min_grid_steps=None):
    """Pallas implementation of ConditionalNeuralProcess.forward."""
    B, Nc, dx = context_x.shape
    _, _, dy = context_y.shape
    _, Nt, _ = target_x.shape

    we1, be1, we2, be2, wd1, bd1, wd2, bd2 = params
    H, dr, H2 = we1.shape[1], we2.shape[1], wd1.shape[1]

    if min_grid_steps is None:
        # Keep >=2 grid steps on 2-TC chips (v7x) so "parallel" shards across cores;
        # on single-TC chips (v5e/v6e) prefer the fewest, fattest steps.
        min_grid_steps = _tensorcores_per_chip()

    bb = (_pick_block_batch(B, Nc, Nt, min_steps=min_grid_steps)
          if block_batch is None else block_batch)
    assert B % bb == 0, "block_batch must divide the batch size"
    assert bb == B or bb % 8 == 0, (
        "block_batch must be a multiple of 8 (or equal to B) so every block "
        "satisfies the (8,128) tiling rule")
    nb = B // bb
    has_ty = target_y is not None

    # ---- Wrapper-side layout plumbing (free) ----
    # Context: concat + flatten batch-major.
    fc = jnp.concatenate([context_x, context_y], axis=-1).reshape(B * Nc, dx + dy)

    # Targets: within each block of bb batches, order rows as (target j, batch b)
    # so the kernel can repack probs lane-densely with contiguous row slices.
    def _to_tmajor(t):
        d = t.shape[-1]
        return t.reshape(nb, bb, Nt, d).transpose(0, 2, 1, 3).reshape(B * Nt, d)

    tx = _to_tmajor(target_x)

    # Constant per-block matrices, hoisted out of the kernel body.
    avg = jnp.kron(jnp.eye(bb, dtype=jnp.float32),
                   jnp.full((1, Nc), 1.0 / Nc, dtype=jnp.float32))      # (bb, bb*Nc)
    expand = jnp.tile(jnp.eye(bb, dtype=jnp.float32), (Nt, 1))          # (bb*Nt, bb)

    # Split decoder layer-1 weight so the in-kernel concat becomes a sum of matmuls.
    wd1x, wd1r = wd1[:dx], wd1[dx:]

    # bf16 matmul operands only once contraction dims reach MXU size.
    mm_dtype = jnp.bfloat16 if min(dx + dy, H, dr, H2) >= 128 else jnp.float32

    weight_arrays = [we1, be1, we2, be2, wd1x, wd1r, bd1, wd2, bd2]

    in_specs = [
        pl.BlockSpec((bb * Nc, dx + dy), lambda b: (b, 0)),
        pl.BlockSpec((bb * Nt, dx), lambda b: (b, 0)),
    ]
    inputs = [fc, tx]
    if has_ty:
        in_specs.append(pl.BlockSpec((bb * Nt, dy), lambda b: (b, 0)))
        inputs.append(_to_tmajor(target_y))
    in_specs += [pl.BlockSpec(avg.shape, lambda b: (0, 0)),
                 pl.BlockSpec(expand.shape, lambda b: (0, 0))]
    inputs += [avg, expand]
    in_specs += [pl.BlockSpec(w.shape, lambda b: (0, 0)) for w in weight_arrays]
    inputs += weight_arrays

    # Lane-dense probs output: (B, Nt*dy) HBM array, (bb, Nt*dy) block.
    out_specs = [pl.BlockSpec((bb, Nt * dy), lambda b: (b, 0))]
    out_shapes = [jax.ShapeDtypeStruct((B, Nt * dy), jnp.float32)]
    if has_ty:
        # One CE scalar per grid step; (·,1,1) block is tiling-legal and parallel-safe.
        out_specs.append(pl.BlockSpec((None, 1, 1), lambda b: (b, 0, 0)))
        out_shapes.append(jax.ShapeDtypeStruct((nb, 1, 1), jnp.float32))

    # Rough per-step VMEM estimate; only raise the scoped limit when needed.
    blk_elems = (bb * Nc * (dx + dy) + bb * Nt * dx + bb * Nt * dy
                 + (bb * Nt * dy if has_ty else 0))
    const_elems = avg.size + expand.size + sum(int(w.size) for w in weight_arrays)
    scratch_elems = bb * Nc * max(H, dr) + 3 * bb * Nt * max(H2, dy) + bb * (dr + H2)
    vmem_est = 4 * (2 * blk_elems + 2 * const_elems + scratch_elems)
    cp_kwargs = dict(dimension_semantics=("parallel",))
    if vmem_est > 24 * 2 ** 20:
        cp_kwargs["vmem_limit_bytes"] = int(min(2 * vmem_est, 64 * 2 ** 20))

    grid_spec = pltpu.PrefetchScalarGridSpec(
        num_scalar_prefetch=0,
        grid=(nb,),
        in_specs=in_specs,
        out_specs=tuple(out_specs),
    )

    outs = pl.pallas_call(
        _make_cnp_kernel(bb, Nt, dy, has_ty, mm_dtype),
        grid_spec=grid_spec,
        out_shape=tuple(out_shapes),
        compiler_params=pltpu.CompilerParams(**cp_kwargs),
    )(*inputs)

    probs = outs[0].reshape(B, Nt, dy)
    if has_ty:
        loss = jnp.sum(outs[1]) / (B * Nt)   # == torch.mean over (B, Nt) per-site CE
        return probs, loss
    return probs


# --------------------------------------------------------------------------- #
# Pure-JAX reference (mirrors the torch module)
# --------------------------------------------------------------------------- #
def _reference_forward(cx, cy, tx, params, ty):
    we1, be1, we2, be2, wd1, bd1, wd2, bd2 = params
    full_context = jnp.concatenate([cx, cy], axis=-1)
    h = jax.nn.relu(full_context @ we1 + be1)
    enc = h @ we2 + be2
    r = jnp.mean(enc, axis=1)
    r = jnp.tile(r[:, None, :], (1, tx.shape[1], 1))
    di = jnp.concatenate([tx, r], axis=-1)
    h2 = jax.nn.relu(di @ wd1 + bd1)
    probs = jax.nn.softmax(h2 @ wd2 + bd2, axis=-1)
    loss = jnp.mean(-jnp.sum(ty * jnp.log(probs + 1e-6), axis=-1))
    return probs, loss


if __name__ == "__main__":
    B, Nc, Nt = 16, 8, 8
    dx, dy = 8, 16          # dy = number of amino acid classes; Nt*dy = 128 lanes
    H, dr, H2 = 32, 32, 32

    key = jax.random.PRNGKey(0)
    ks = jax.random.split(key, 8)

    context_x = jax.random.normal(ks[0], (B, Nc, dx), jnp.float32)
    context_y = jax.nn.one_hot(
        jax.random.randint(ks[1], (B, Nc), 0, dy), dy).astype(jnp.float32)
    target_x = jax.random.normal(ks[2], (B, Nt, dx), jnp.float32)
    target_y = jax.nn.one_hot(
        jax.random.randint(ks[3], (B, Nt), 0, dy), dy).astype(jnp.float32)

    params = (
        0.1 * jax.random.normal(ks[4], (dx + dy, H), jnp.float32),   # encoder W1
        jnp.zeros((1, H), jnp.float32),                              # encoder b1
        0.1 * jax.random.normal(ks[5], (H, dr), jnp.float32),        # encoder W2
        jnp.zeros((1, dr), jnp.float32),                             # encoder b2
        0.1 * jax.random.normal(ks[6], (dx + dr, H2), jnp.float32),  # decoder W1
        jnp.zeros((1, H2), jnp.float32),                             # decoder b1
        0.1 * jax.random.normal(ks[7], (H2, dy), jnp.float32),       # decoder W2
        jnp.zeros((1, dy), jnp.float32),                             # decoder b2
    )

    probs_ref, loss_ref = _reference_forward(
        context_x, context_y, target_x, params, target_y)

    # Training path, auto block-batch (fattest legal blocks; >=2 steps on 2-TC chips).
    probs, loss = cnp_forward(context_x, context_y, target_x, params, target_y)
    jax.block_until_ready((probs, loss))
    assert jnp.allclose(probs, probs_ref, atol=1e-5, rtol=1e-5)
    assert jnp.allclose(loss, loss_ref, atol=1e-5, rtol=1e-5)

    # Training path with an explicit 2-step grid (8 batches fused per step).
    probs2, loss2 = cnp_forward(context_x, context_y, target_x, params, target_y,
                                block_batch=8)
    jax.block_until_ready((probs2, loss2))
    assert jnp.allclose(probs2, probs_ref, atol=1e-5, rtol=1e-5)
    assert jnp.allclose(loss2, loss_ref, atol=1e-5, rtol=1e-5)

    # Inference path (target_y=None): separate pallas_call variant without ty/CE.
    probs_only = cnp_forward(context_x, context_y, target_x, params, block_batch=8)
    jax.block_until_ready(probs_only)
    assert jnp.allclose(probs_only, probs_ref, atol=1e-5, rtol=1e-5)

    print("KERNEL_OK")
</pallas_src>

<mosaic_0001>
module attributes {stable_mosaic.version = 11 : i64} {
  func.func @kernel(%arg0: i32, %arg1: memref<128x24xf32, #tpu.memory_space<vmem>>, %arg2: memref<128x8xf32, #tpu.memory_space<vmem>>, %arg3: memref<128x16xf32, #tpu.memory_space<vmem>>, %arg4: memref<16x128xf32, #tpu.memory_space<vmem>>, %arg5: memref<128x16xf32, #tpu.memory_space<vmem>>, %arg6: memref<24x32xf32, #tpu.memory_space<vmem>>, %arg7: memref<1x32xf32, #tpu.memory_space<vmem>>, %arg8: memref<32x32xf32, #tpu.memory_space<vmem>>, %arg9: memref<1x32xf32, #tpu.memory_space<vmem>>, %arg10: memref<8x32xf32, #tpu.memory_space<vmem>>, %arg11: memref<32x32xf32, #tpu.memory_space<vmem>>, %arg12: memref<1x32xf32, #tpu.memory_space<vmem>>, %arg13: memref<32x16xf32, #tpu.memory_space<vmem>>, %arg14: memref<1x16xf32, #tpu.memory_space<vmem>>, %arg15: memref<16x128xf32, #tpu.memory_space<vmem>>, %arg16: memref<1x1x1xf32, #tpu.memory_space<vmem>>) attributes {dimension_semantics = [#tpu.dimension_semantics<parallel>], iteration_bounds = array<i64: 1>, scalar_prefetch = 0 : i64, scratch_operands = 0 : i64, tpu.core_type = #tpu.core_type<tc>, window_params = [{transform_indices = @transform_0, window_bounds = array<i64: 128, 24>}, {transform_indices = @transform_1, window_bounds = array<i64: 128, 8>}, {transform_indices = @transform_2, window_bounds = array<i64: 128, 16>}, {pipeline_mode = #tpu.pipeline_mode<synchronous>, transform_indices = @transform_3, window_bounds = array<i64: 16, 128>}, {pipeline_mode = #tpu.pipeline_mode<synchronous>, transform_indices = @transform_4, window_bounds = array<i64: 128, 16>}, {pipeline_mode = #tpu.pipeline_mode<synchronous>, transform_indices = @transform_5, window_bounds = array<i64: 24, 32>}, {pipeline_mode = #tpu.pipeline_mode<synchronous>, transform_indices = @transform_6, window_bounds = array<i64: 1, 32>}, {pipeline_mode = #tpu.pipeline_mode<synchronous>, transform_indices = @transform_7, window_bounds = array<i64: 32, 32>}, {pipeline_mode = #tpu.pipeline_mode<synchronous>, transform_indices = @transform_8, window_bounds = array<i64: 1, 32>}, {pipeline_mode = #tpu.pipeline_mode<synchronous>, transform_indices = @transform_9, window_bounds = array<i64: 8, 32>}, {pipeline_mode = #tpu.pipeline_mode<synchronous>, transform_indices = @transform_10, window_bounds = array<i64: 32, 32>}, {pipeline_mode = #tpu.pipeline_mode<synchronous>, transform_indices = @transform_11, window_bounds = array<i64: 1, 32>}, {pipeline_mode = #tpu.pipeline_mode<synchronous>, transform_indices = @transform_12, window_bounds = array<i64: 32, 16>}, {pipeline_mode = #tpu.pipeline_mode<synchronous>, transform_indices = @transform_13, window_bounds = array<i64: 1, 16>}, {transform_indices = @transform_14, window_bounds = array<i64: 16, 128>}, {transform_indices = @transform_15, window_bounds = array<i64: 1, 1, 1>}]} {
    %c0 = arith.constant 0 : index
    %c0_0 = arith.constant 0 : index
    %0 = vector.load %arg1[%c0, %c0_0] : memref<128x24xf32, #tpu.memory_space<vmem>>, vector<128x24xf32>
    %c0_1 = arith.constant 0 : index
    %c0_2 = arith.constant 0 : index
    %1 = vector.load %arg6[%c0_1, %c0_2] : memref<24x32xf32, #tpu.memory_space<vmem>>, vector<24x32xf32>
    %cst = arith.constant dense<0.000000e+00> : vector<128x32xf32>
    %2 = tpu.matmul %0, %1, %cst {dimension_numbers = #tpu.dot_dimension_numbers<[1], [0], [0], [1], [0, 0, 1, 1], [], []>} : vector<128x24xf32>, vector<24x32xf32>, vector<128x32xf32> -> vector<128x32xf32>
    %c0_3 = arith.constant 0 : index
    %c0_4 = arith.constant 0 : index
    %3 = vector.load %arg7[%c0_3, %c0_4] : memref<1x32xf32, #tpu.memory_space<vmem>>, vector<1x32xf32>
    %4 = vector.broadcast %3 : vector<1x32xf32> to vector<128x32xf32>
    %5 = arith.addf %2, %4 : vector<128x32xf32>
    %cst_5 = arith.constant 0.000000e+00 : f32
    %6 = vector.broadcast %cst_5 : f32 to vector<128x32xf32>
    %7 = arith.maximumf %5, %6 : vector<128x32xf32>
    %c0_6 = arith.constant 0 : index
    %c0_7 = arith.constant 0 : index
    %8 = vector.load %arg8[%c0_6, %c0_7] : memref<32x32xf32, #tpu.memory_space<vmem>>, vector<32x32xf32>
    %cst_8 = arith.constant dense<0.000000e+00> : vector<128x32xf32>
    %9 = tpu.matmul %7, %8, %cst_8 {dimension_numbers = #tpu.dot_dimension_numbers<[1], [0], [0], [1], [0, 0, 1, 1], [], []>} : vector<128x32xf32>, vector<32x32xf32>, vector<128x32xf32> -> vector<128x32xf32>
    %c0_9 = arith.constant 0 : index
    %c0_10 = arith.constant 0 : index
    %10 = vector.load %arg9[%c0_9, %c0_10] : memref<1x32xf32, #tpu.memory_space<vmem>>, vector<1x32xf32>
    %11 = vector.broadcast %10 : vector<1x32xf32> to vector<128x32xf32>
    %12 = arith.addf %9, %11 : vector<128x32xf32>
    %c0_11 = arith.constant 0 : index
    %c0_12 = arith.constant 0 : index
    %13 = vector.load %arg4[%c0_11, %c0_12] : memref<16x128xf32, #tpu.memory_space<vmem>>, vector<16x128xf32>
    %cst_13 = arith.constant dense<0.000000e+00> : vector<16x32xf32>
    %14 = tpu.matmul %13, %12, %cst_13 {dimension_numbers = #tpu.dot_dimension_numbers<[1], [0], [0], [1], [0, 0, 1, 1], [], []>} : vector<16x128xf32>, vector<128x32xf32>, vector<16x32xf32> -> vector<16x32xf32>
    %c0_14 = arith.constant 0 : index
    %c0_15 = arith.constant 0 : index
    %15 = vector.load %arg11[%c0_14, %c0_15] : memref<32x32xf32, #tpu.memory_space<vmem>>, vector<32x32xf32>
    %cst_16 = arith.constant dense<0.000000e+00> : vector<16x32xf32>
    %16 = tpu.matmul %14, %15, %cst_16 {dimension_numbers = #tpu.dot_dimension_numbers<[1], [0], [0], [1], [0, 0, 1, 1], [], []>} : vector<16x32xf32>, vector<32x32xf32>, vector<16x32xf32> -> vector<16x32xf32>
    %c0_17 = arith.constant 0 : index
    %c0_18 = arith.constant 0 : index
    %17 = vector.load %arg12[%c0_17, %c0_18] : memref<1x32xf32, #tpu.memory_space<vmem>>, vector<1x32xf32>
    %18 = vector.broadcast %17 : vector<1x32xf32> to vector<16x32xf32>
    %19 = arith.addf %16, %18 : vector<16x32xf32>
    %c0_19 = arith.constant 0 : index
    %c0_20 = arith.constant 0 : index
    %20 = vector.load %arg2[%c0_19, %c0_20] : memref<128x8xf32, #tpu.memory_space<vmem>>, vector<128x8xf32>
    %c0_21 = arith.constant 0 : index
    %c0_22 = arith.constant 0 : index
    %21 = vector.load %arg10[%c0_21, %c0_22] : memref<8x32xf32, #tpu.memory_space<vmem>>, vector<8x32xf32>
    %cst_23 = arith.constant dense<0.000000e+00> : vector<128x32xf32>
    %22 = tpu.matmul %20, %21, %cst_23 {dimension_numbers = #tpu.dot_dimension_numbers<[1], [0], [0], [1], [0, 0, 1, 1], [], []>} : vector<128x8xf32>, vector<8x32xf32>, vector<128x32xf32> -> vector<128x32xf32>
    %c0_24 = arith.constant 0 : index
    %c0_25 = arith.constant 0 : index
    %23 = vector.load %arg5[%c0_24, %c0_25] : memref<128x16xf32, #tpu.memory_space<vmem>>, vector<128x16xf32>
    %cst_26 = arith.constant dense<0.000000e+00> : vector<128x32xf32>
    %24 = tpu.matmul %23, %19, %cst_26 {dimension_numbers = #tpu.dot_dimension_numbers<[1], [0], [0], [1], [0, 0, 1, 1], [], []>} : vector<128x16xf32>, vector<16x32xf32>, vector<128x32xf32> -> vector<128x32xf32>
    %25 = arith.addf %22, %24 : vector<128x32xf32>
    %cst_27 = arith.constant 0.000000e+00 : f32
    %26 = vector.broadcast %cst_27 : f32 to vector<128x32xf32>
    %27 = arith.maximumf %25, %26 : vector<128x32xf32>
    %c0_28 = arith.constant 0 : index
    %c0_29 = arith.constant 0 : index
    %28 = vector.load %arg13[%c0_28, %c0_29] : memref<32x16xf32, #tpu.memory_space<vmem>>, vector<32x16xf32>
    %cst_30 = arith.constant dense<0.000000e+00> : vector<128x16xf32>
    %29 = tpu.matmul %27, %28, %cst_30 {dimension_numbers = #tpu.dot_dimension_numbers<[1], [0], [0], [1], [0, 0, 1, 1], [], []>} : vector<128x32xf32>, vector<32x16xf32>, vector<128x16xf32> -> vector<128x16xf32>
    %c0_31 = arith.constant 0 : index
    %c0_32 = arith.constant 0 : index
    %30 = vector.load %arg14[%c0_31, %c0_32] : memref<1x16xf32, #tpu.memory_space<vmem>>, vector<1x16xf32>
    %31 = vector.broadcast %30 : vector<1x16xf32> to vector<128x16xf32>
    %32 = arith.addf %29, %31 : vector<128x16xf32>
    %cst_33 = arith.constant dense<0xFF800000> : vector<128xf32>
    %33 = vector.multi_reduction <maximumf>, %32, %cst_33 [1] : vector<128x16xf32> to vector<128xf32>
    %34 = vector.shape_cast %33 : vector<128xf32> to vector<128x1xf32>
    %35 = vector.broadcast %34 : vector<128x1xf32> to vector<128x16xf32>
    %36 = arith.subf %32, %35 : vector<128x16xf32>
    %37 = math.exp %36 : vector<128x16xf32>
    %cst_34 = arith.constant dense<0.000000e+00> : vector<128xf32>
    %38 = vector.multi_reduction <add>, %37, %cst_34 [1] : vector<128x16xf32> to vector<128xf32>
    %39 = vector.shape_cast %38 : vector<128xf32> to vector<128x1xf32>
    %40 = tpu.reciprocal %39 : vector<128x1xf32> -> vector<128x1xf32>
    %41 = vector.broadcast %40 : vector<128x1xf32> to vector<128x16xf32>
    %42 = arith.mulf %37, %41 : vector<128x16xf32>
    %43 = vector.extract_strided_slice %42 {offsets = [0, 0], sizes = [16, 16], strides = [1, 1]} : vector<128x16xf32> to vector<16x16xf32>
    %c0_35 = arith.constant 0 : index
    %c0_36 = arith.constant 0 : index
    %44 = vector.load %arg15[%c0_35, %c0_36] : memref<16x128xf32, #tpu.memory_space<vmem>>, vector<16x16xf32>
    tpu.vector_store %arg15[%c0_35, %c0_36], %43 {strides = array<i32>} : memref<16x128xf32, #tpu.memory_space<vmem>>, vector<16x16xf32>,
    %45 = vector.extract_strided_slice %42 {offsets = [16, 0], sizes = [16, 16], strides = [1, 1]} : vector<128x16xf32> to vector<16x16xf32>
    %c0_37 = arith.constant 0 : index
    %c16 = arith.constant 16 : index
    %46 = vector.load %arg15[%c0_37, %c16] : memref<16x128xf32, #tpu.memory_space<vmem>>, vector<16x16xf32>
    tpu.vector_store %arg15[%c0_37, %c16], %45 {strides = array<i32>} : memref<16x128xf32, #tpu.memory_space<vmem>>, vector<16x16xf32>,
    %47 = vector.extract_strided_slice %42 {offsets = [32, 0], sizes = [16, 16], strides = [1, 1]} : vector<128x16xf32> to vector<16x16xf32>
    %c0_38 = arith.constant 0 : index
    %c32 = arith.constant 32 : index
    %48 = vector.load %arg15[%c0_38, %c32] : memref<16x128xf32, #tpu.memory_space<vmem>>, vector<16x16xf32>
    tpu.vector_store %arg15[%c0_38, %c32], %47 {strides = array<i32>} : memref<16x128xf32, #tpu.memory_space<vmem>>, vector<16x16xf32>,
    %49 = vector.extract_strided_slice %42 {offsets = [48, 0], sizes = [16, 16], strides = [1, 1]} : vector<128x16xf32> to vector<16x16xf32>
    %c0_39 = arith.constant 0 : index
    %c48 = arith.constant 48 : index
    %50 = vector.load %arg15[%c0_39, %c48] : memref<16x128xf32, #tpu.memory_space<vmem>>, vector<16x16xf32>
    tpu.vector_store %arg15[%c0_39, %c48], %49 {strides = array<i32>} : memref<16x128xf32, #tpu.memory_space<vmem>>, vector<16x16xf32>,
    %51 = vector.extract_strided_slice %42 {offsets = [64, 0], sizes = [16, 16], strides = [1, 1]} : vector<128x16xf32> to vector<16x16xf32>
    %c0_40 = arith.constant 0 : index
    %c64 = arith.constant 64 : index
    %52 = vector.load %arg15[%c0_40, %c64] : memref<16x128xf32, #tpu.memory_space<vmem>>, vector<16x16xf32>
    tpu.vector_store %arg15[%c0_40, %c64], %51 {strides = array<i32>} : memref<16x128xf32, #tpu.memory_space<vmem>>, vector<16x16xf32>,
    %53 = vector.extract_strided_slice %42 {offsets = [80, 0], sizes = [16, 16], strides = [1, 1]} : vector<128x16xf32> to vector<16x16xf32>
    %c0_41 = arith.constant 0 : index
    %c80 = arith.constant 80 : index
    %54 = vector.load %arg15[%c0_41, %c80] : memref<16x128xf32, #tpu.memory_space<vmem>>, vector<16x16xf32>
    tpu.vector_store %arg15[%c0_41, %c80], %53 {strides = array<i32>} : memref<16x128xf32, #tpu.memory_space<vmem>>, vector<16x16xf32>,
    %55 = vector.extract_strided_slice %42 {offsets = [96, 0], sizes = [16, 16], strides = [1, 1]} : vector<128x16xf32> to vector<16x16xf32>
    %c0_42 = arith.constant 0 : index
    %c96 = arith.constant 96 : index
    %56 = vector.load %arg15[%c0_42, %c96] : memref<16x128xf32, #tpu.memory_space<vmem>>, vector<16x16xf32>
    tpu.vector_store %arg15[%c0_42, %c96], %55 {strides = array<i32>} : memref<16x128xf32, #tpu.memory_space<vmem>>, vector<16x16xf32>,
    %57 = vector.extract_strided_slice %42 {offsets = [112, 0], sizes = [16, 16], strides = [1, 1]} : vector<128x16xf32> to vector<16x16xf32>
    %c0_43 = arith.constant 0 : index
    %c112 = arith.constant 112 : index
    %58 = vector.load %arg15[%c0_43, %c112] : memref<16x128xf32, #tpu.memory_space<vmem>>, vector<16x16xf32>
    tpu.vector_store %arg15[%c0_43, %c112], %57 {strides = array<i32>} : memref<16x128xf32, #tpu.memory_space<vmem>>, vector<16x16xf32>,
    %c0_44 = arith.constant 0 : index
    %c0_45 = arith.constant 0 : index
    %59 = vector.load %arg3[%c0_44, %c0_45] : memref<128x16xf32, #tpu.memory_space<vmem>>, vector<128x16xf32>
    %cst_46 = arith.constant 9.99999997E-7 : f32
    %60 = vector.broadcast %cst_46 : f32 to vector<128x16xf32>
    %61 = arith.addf %42, %60 : vector<128x16xf32>
    %62 = math.log %61 : vector<128x16xf32>
    %63 = arith.mulf %59, %62 : vector<128x16xf32>
    %64 = vector.shape_cast %63 : vector<128x16xf32> to vector<1x128x16xf32>
    %cst_47 = arith.constant dense<0.000000e+00> : vector<1xf32>
    %65 = vector.multi_reduction <add>, %64, %cst_47 [1, 2] : vector<1x128x16xf32> to vector<1xf32>
    %66 = vector.shape_cast %65 : vector<1xf32> to vector<1x1x1xf32>
    %67 = vector.extract %66[0, 0, 0] : f32 from vector<1x1x1xf32>
    %68 = vector.broadcast %67 : f32 to vector<1x1xf32>
    %cst_48 = arith.constant 0.000000e+00 : f32
    %69 = vector.broadcast %cst_48 : f32 to vector<1x1xf32>
    %70 = arith.subf %69, %68 : vector<1x1xf32>
    %c0_49 = arith.constant 0 : index
    %c0_50 = arith.constant 0 : index
    %c0_51 = arith.constant 0 : index
    %71 = vector.load %arg16[%c0_49, %c0_50, %c0_51] : memref<1x1x1xf32, #tpu.memory_space<vmem>>, vector<1x1x1xf32>
    %72 = vector.shape_cast %71 : vector<1x1x1xf32> to vector<1x1xf32>
    %73 = vector.shape_cast %70 : vector<1x1xf32> to vector<1x1x1xf32>
    tpu.vector_store %arg16[%c0_49, %c0_50, %c0_51], %73 {strides = array<i32>} : memref<1x1x1xf32, #tpu.memory_space<vmem>>, vector<1x1x1xf32>,
    return
  }
  func.func @transform_0(%arg0: i32) -> (i32, i32) {
    %c0_i32 = arith.constant 0 : i32
    %c0_i32_0 = arith.constant 0 : i32
    return %arg0, %c0_i32 : i32, i32
  }
  func.func @transform_1(%arg0: i32) -> (i32, i32) {
    %c0_i32 = arith.constant 0 : i32
    %c0_i32_0 = arith.constant 0 : i32
    return %arg0, %c0_i32 : i32, i32
  }
  func.func @transform_2(%arg0: i32) -> (i32, i32) {
    %c0_i32 = arith.constant 0 : i32
    %c0_i32_0 = arith.constant 0 : i32
    return %arg0, %c0_i32 : i32, i32
  }
  func.func @transform_3(%arg0: i32) -> (i32, i32) {
    %c0_i32 = arith.constant 0 : i32
    %c0_i32_0 = arith.constant 0 : i32
    %c0_i32_1 = arith.constant 0 : i32
    return %c0_i32, %c0_i32_0 : i32, i32
  }
  func.func @transform_4(%arg0: i32) -> (i32, i32) {
    %c0_i32 = arith.constant 0 : i32
    %c0_i32_0 = arith.constant 0 : i32
    %c0_i32_1 = arith.constant 0 : i32
    return %c0_i32, %c0_i32_0 : i32, i32
  }
  func.func @transform_5(%arg0: i32) -> (i32, i32) {
    %c0_i32 = arith.constant 0 : i32
    %c0_i32_0 = arith.constant 0 : i32
    %c0_i32_1 = arith.constant 0 : i32
    return %c0_i32, %c0_i32_0 : i32, i32
  }
  func.func @transform_6(%arg0: i32) -> (i32, i32) {
    %c0_i32 = arith.constant 0 : i32
    %c0_i32_0 = arith.constant 0 : i32
    %c0_i32_1 = arith.constant 0 : i32
    return %c0_i32, %c0_i32_0 : i32, i32
  }
  func.func @transform_7(%arg0: i32) -> (i32, i32) {
    %c0_i32 = arith.constant 0 : i32
    %c0_i32_0 = arith.constant 0 : i32
    %c0_i32_1 = arith.constant 0 : i32
    return %c0_i32, %c0_i32_0 : i32, i32
  }
  func.func @transform_8(%arg0: i32) -> (i32, i32) {
    %c0_i32 = arith.constant 0 : i32
    %c0_i32_0 = arith.constant 0 : i32
    %c0_i32_1 = arith.constant 0 : i32
    return %c0_i32, %c0_i32_0 : i32, i32
  }
  func.func @transform_9(%arg0: i32) -> (i32, i32) {
    %c0_i32 = arith.constant 0 : i32
    %c0_i32_0 = arith.constant 0 : i32
    %c0_i32_1 = arith.constant 0 : i32
    return %c0_i32, %c0_i32_0 : i32, i32
  }
  func.func @transform_10(%arg0: i32) -> (i32, i32) {
    %c0_i32 = arith.constant 0 : i32
    %c0_i32_0 = arith.constant 0 : i32
    %c0_i32_1 = arith.constant 0 : i32
    return %c0_i32, %c0_i32_0 : i32, i32
  }
  func.func @transform_11(%arg0: i32) -> (i32, i32) {
    %c0_i32 = arith.constant 0 : i32
    %c0_i32_0 = arith.constant 0 : i32
    %c0_i32_1 = arith.constant 0 : i32
    return %c0_i32, %c0_i32_0 : i32, i32
  }
  func.func @transform_12(%arg0: i32) -> (i32, i32) {
    %c0_i32 = arith.constant 0 : i32
    %c0_i32_0 = arith.constant 0 : i32
    %c0_i32_1 = arith.constant 0 : i32
    return %c0_i32, %c0_i32_0 : i32, i32
  }
  func.func @transform_13(%arg0: i32) -> (i32, i32) {
    %c0_i32 = arith.constant 0 : i32
    %c0_i32_0 = arith.constant 0 : i32
    %c0_i32_1 = arith.constant 0 : i32
    return %c0_i32, %c0_i32_0 : i32, i32
  }
  func.func @transform_14(%arg0: i32) -> (i32, i32) {
    %c0_i32 = arith.constant 0 : i32
    %c0_i32_0 = arith.constant 0 : i32
    return %arg0, %c0_i32 : i32, i32
  }
  func.func @transform_15(%arg0: i32) -> (i32, i32, i32) {
    %c0_i32 = arith.constant 0 : i32
    %c0_i32_0 = arith.constant 0 : i32
    %c0_i32_1 = arith.constant 0 : i32
    return %arg0, %c0_i32, %c0_i32_0 : i32, i32, i32
  }
}

</mosaic_0001>

<llo_original>
// kernel: tpu_custom_call.1
$region0: #{tpu_custom_call.1}
  #allocation0 [shape = 'u32[]', space=smem, size = 0x4, offset = 0x4, fixed_abs, tag = 'smem constant byte address 0x4 - core index']
  #allocation1 [shape = 'u32[144,128]{1,0:T(1,128)}', space=vmem, size = 0x12000, scoped, tag = 'internal scratch']
  %s0 = inlined_call_operand.vmem [shape: f32[128,24], index: 0, kind: input, shape index: {}]
  %s1 = inlined_call_operand.vmem [shape: f32[128,8], index: 1, kind: input, shape index: {}]
  %s2 = inlined_call_operand.vmem [shape: f32[128,16], index: 2, kind: input, shape index: {}]
  %s3 = inlined_call_operand.vmem [shape: f32[16,128], index: 3, kind: input, shape index: {}]
  %s4 = inlined_call_operand.vmem [shape: f32[128,16], index: 4, kind: input, shape index: {}]
  %s5 = inlined_call_operand.vmem [shape: f32[24,32], index: 5, kind: input, shape index: {}]
  %s6 = inlined_call_operand.vmem [shape: f32[1,32], index: 6, kind: input, shape index: {}]
  %s7 = inlined_call_operand.vmem [shape: f32[32,32], index: 7, kind: input, shape index: {}]
  %s8 = inlined_call_operand.vmem [shape: f32[1,32], index: 8, kind: input, shape index: {}]
  %s9 = inlined_call_operand.vmem [shape: f32[8,32], index: 9, kind: input, shape index: {}]
  %s10 = inlined_call_operand.vmem [shape: f32[32,32], index: 10, kind: input, shape index: {}]
  %s11 = inlined_call_operand.vmem [shape: f32[1,32], index: 11, kind: input, shape index: {}]
  %s12 = inlined_call_operand.vmem [shape: f32[32,16], index: 12, kind: input, shape index: {}]
  %s13 = inlined_call_operand.vmem [shape: f32[1,16], index: 13, kind: input, shape index: {}]
  %s14 = inlined_call_operand.hbm [shape: f32[16,128], index: 14, kind: output, shape index: {0}]
  %s15 = inlined_call_operand.hbm [shape: f32[1,1,1], index: 15, kind: output, shape index: {1}]
  %16 = xla_tuple %s14, %s15
  %s17 = sld [smem:[#allocation0]]
  $region74: #{tpu_custom_call.1} parent=0
    _
  %s19 = ssub.s32 1, %s17
  %s20 = scalar_select 0, %s19, %s17
  $region1: #{tpu_custom_call.1} parent=0
    #allocation2 [shape = 'u8[8192]{0}', space=vmem, size = 0x2000, scoped, tag = 'output window, operand 0, single buffered']
    #allocation3 [shape = 's32[1]{0}', space=sflag, size = 0x4, scoped, tag = 'scoped memory for tpu_custom_call.1']
    #allocation4 [shape = 'u8[512]{0}', space=vmem, size = 0x400, scoped, tag = 'output window, operand 1, single buffered']
    #allocation5 [shape = 's32[1]{0}', space=sflag, size = 0x4, scoped, tag = 'scoped memory for tpu_custom_call.1']
    %21 = vsyncpa [#allocation3], 0
    %22 = vsyncpa [#allocation5], 0
    // Predicated region
    $region2: #{tpu_custom_call.1} parent=1 // pred_check
      _
    $region3: #{tpu_custom_call.1} parent=1 // pred_check_branch
      %24 = sbr.rel (0) target = $region5
    $region4: #{tpu_custom_call.1} parent=1 // pred_region
      _
    $region5: #{tpu_custom_call.1} parent=1 // pred_fallthru
      _
    // Predicated region
    $region6: #{tpu_custom_call.1} parent=1 // pred_check
      _
    $region7: #{tpu_custom_call.1} parent=1 // pred_check_branch
      %26 = sbr.rel (0) target = $region9
    $region8: #{tpu_custom_call.1} parent=1 // pred_region
      _
    $region9: #{tpu_custom_call.1} parent=1 // pred_fallthru
      _
    // Predicated region
    $region10: #{tpu_custom_call.1} parent=1 // pred_check
      _
    $region11: #{tpu_custom_call.1} parent=1 // pred_check_branch
      %28 = sbr.rel (0) target = $region13
    $region12: #{tpu_custom_call.1} parent=1 // pred_region
      _
    $region13: #{tpu_custom_call.1} parent=1 // pred_fallthru
      _
    // Predicated region
    $region14: #{tpu_custom_call.1} parent=1 // pred_check
      _
    $region15: #{tpu_custom_call.1} parent=1 // pred_check_branch
      %30 = sbr.rel (0) target = $region17
    $region16: #{tpu_custom_call.1} parent=1 // pred_region
      _
    $region17: #{tpu_custom_call.1} parent=1 // pred_fallthru
      _
    // Predicated region
    $region18: #{tpu_custom_call.1} parent=1 // pred_check
      _
    $region19: #{tpu_custom_call.1} parent=1 // pred_check_branch
      %32 = sbr.rel (0) target = $region21
    $region20: #{tpu_custom_call.1} parent=1 // pred_region
      _
    $region21: #{tpu_custom_call.1} parent=1 // pred_fallthru
      _
    // Predicated region
    $region22: #{tpu_custom_call.1} parent=1 // pred_check
      _
    $region23: #{tpu_custom_call.1} parent=1 // pred_check_branch
      %34 = sbr.rel (0) target = $region25
    $region24: #{tpu_custom_call.1} parent=1 // pred_region
      _
    $region25: #{tpu_custom_call.1} parent=1 // pred_fallthru
      _
    // Predicated region
    $region26: #{tpu_custom_call.1} parent=1 // pred_check
      _
    $region27: #{tpu_custom_call.1} parent=1 // pred_check_branch
      %36 = sbr.rel (0) target = $region29
    $region28: #{tpu_custom_call.1} parent=1 // pred_region
      _
    $region29: #{tpu_custom_call.1} parent=1 // pred_fallthru
      _
    // Predicated region
    $region30: #{tpu_custom_call.1} parent=1 // pred_check
      _
    $region31: #{tpu_custom_call.1} parent=1 // pred_check_branch
      %38 = sbr.rel (0) target = $region33
    $region32: #{tpu_custom_call.1} parent=1 // pred_region
      _
    $region33: #{tpu_custom_call.1} parent=1 // pred_fallthru
      _
    // Predicated region
    $region34: #{tpu_custom_call.1} parent=1 // pred_check
      _
    $region35: #{tpu_custom_call.1} parent=1 // pred_check_branch
      %40 = sbr.rel (0) target = $region37
    $region36: #{tpu_custom_call.1} parent=1 // pred_region
      _
    $region37: #{tpu_custom_call.1} parent=1 // pred_fallthru
      _
    // Predicated region
    $region38: #{tpu_custom_call.1} parent=1 // pred_check
      _
    $region39: #{tpu_custom_call.1} parent=1 // pred_check_branch
      %42 = sbr.rel (0) target = $region41
    $region40: #{tpu_custom_call.1} parent=1 // pred_region
      _
    $region41: #{tpu_custom_call.1} parent=1 // pred_fallthru
      _
    // Predicated region
    $region42: #{tpu_custom_call.1} parent=1 // pred_check
      _
    $region43: #{tpu_custom_call.1} parent=1 // pred_check_branch
      %44 = sbr.rel (0) target = $region45
    $region44: #{tpu_custom_call.1} parent=1 // pred_region
      _
    $region45: #{tpu_custom_call.1} parent=1 // pred_fallthru
      _
    // Predicated region
    $region46: #{tpu_custom_call.1} parent=1 // pred_check
      _
    $region47: #{tpu_custom_call.1} parent=1 // pred_check_branch
      %46 = sbr.rel (0) target = $region49
    $region48: #{tpu_custom_call.1} parent=1 // pred_region
      _
    $region49: #{tpu_custom_call.1} parent=1 // pred_fallthru
      _
    // Predicated region
    $region50: #{tpu_custom_call.1} parent=1 // pred_check
      _
    $region51: #{tpu_custom_call.1} parent=1 // pred_check_branch
      %48 = sbr.rel (0) target = $region53
    $region52: #{tpu_custom_call.1} parent=1 // pred_region
      _
    $region53: #{tpu_custom_call.1} parent=1 // pred_fallthru
      _
    // Predicated region
    $region54: #{tpu_custom_call.1} parent=1 // pred_check
      _
    $region55: #{tpu_custom_call.1} parent=1 // pred_check_branch
      %50 = sbr.rel (0) target = $region57
    $region56: #{tpu_custom_call.1} parent=1 // pred_region
      _
    $region57: #{tpu_custom_call.1} parent=1 // pred_fallthru
      _
    %v51 = vld [vmem:[%s0] sm:$0xff]
    %v52 = vld [vmem:[%s0 + $0x8] sm:$0xff]
    %v53 = vld [vmem:[%s0 + $0x10] sm:$0xff]
    %v54 = vld [vmem:[%s0 + $0x18] sm:$0xff]
    %v55 = vld [vmem:[%s0 + $0x20] sm:$0xff]
    %v56 = vld [vmem:[%s0 + $0x28] sm:$0xff]
    %v57 = vld [vmem:[%s0 + $0x30] sm:$0xff]
    %v58 = vld [vmem:[%s0 + $0x38] sm:$0xff]
    %v59 = vld [vmem:[%s0 + $0x40] sm:$0xff]
    %v60 = vld [vmem:[%s0 + $0x48] sm:$0xff]
    %v61 = vld [vmem:[%s0 + $0x50] sm:$0xff]
    %v62 = vld [vmem:[%s0 + $0x58] sm:$0xff]
    %v63 = vld [vmem:[%s0 + $0x60] sm:$0xff]
    %v64 = vld [vmem:[%s0 + $0x68] sm:$0xff]
    %v65 = vld [vmem:[%s0 + $0x70] sm:$0xff]
    %v66 = vld [vmem:[%s0 + $0x78] sm:$0xff]
    %v67 = vld [vmem:[%s5] sm:$0xff]
    %v68 = vld [vmem:[%s5 + $0x8] sm:$0xff]
    %v69 = vld [vmem:[%s5 + $0x10] sm:$0xff]
    %v70 = vld [vmem:[%s6] sm:$0x1]
    %v72 = vlaneseq
    %v73 = vshrl.u32 %v72, 7
    %v74 = vsub.s32 0, %v73
    %v75 = vrot.slane %v70, %v74
    %vm77 = vcmask 195584
    %v79 = vsel %vm77, %v51, 0
    %v82 = vsel %vm77, %v52, 0
    %v85 = vsel %vm77, %v53, 0
    %v88 = vsel %vm77, %v54, 0
    %v91 = vsel %vm77, %v55, 0
    %v94 = vsel %vm77, %v56, 0
    %v97 = vsel %vm77, %v57, 0
    %v100 = vsel %vm77, %v58, 0
    %v103 = vsel %vm77, %v59, 0
    %v106 = vsel %vm77, %v60, 0
    %v109 = vsel %vm77, %v61, 0
    %v112 = vsel %vm77, %v62, 0
    %v115 = vsel %vm77, %v63, 0
    %v118 = vsel %vm77, %v64, 0
    %v121 = vsel %vm77, %v65, 0
    %v124 = vsel %vm77, %v66, 0
    %126 = vmatprep.subr.mxu0 0.0
    %127 = vmatpush1.msra.mxu0 0.0
    %128 = vmatprep.subr.mxu0 0.0
    %129 = vmatpush1.msra.mxu0 0.0
    %130 = vmatprep.subr.mxu0 0.0
    %131 = vmatpush1.msra.mxu0 0.0
    %132 = vmatprep.subr.mxu0 0.0
    %133 = vmatpush1.msra.mxu0 0.0
    %134 = vmatprep.subr.mxu0 0.0
    %135 = vmatpush1.msra.mxu0 0.0
    %136 = vmatprep.subr.mxu0 0.0
    %137 = vmatpush1.msra.mxu0 0.0
    %138 = vmatprep.subr.mxu0 0.0
    %139 = vmatpush1.msra.mxu0 0.0
    %140 = vmatprep.subr.mxu0 0.0
    %141 = vmatpush1.msra.mxu0 0.0
    %142 = vmatprep.subr.mxu0 0.0
    %143 = vmatpush1.msra.mxu0 0.0
    %144 = vmatprep.subr.mxu0 0.0
    %145 = vmatpush1.msra.mxu0 0.0
    %146 = vmatprep.subr.mxu0 0.0
    %147 = vmatpush1.msra.mxu0 0.0
    %148 = vmatprep.subr.mxu0 0.0
    %149 = vmatpush1.msra.mxu0 0.0
    %150 = vmatprep.subr.mxu0 0.0
    %151 = vmatpush1.msra.mxu0 0.0
    %152 = vmatprep.subr.mxu0 0.0
    %153 = vmatpush1.msra.mxu0 %v69
    %154 = vmatprep.subr.mxu0 0.0
    %155 = vmatpush1.msra.mxu0 %v68
    %156 = vmatprep.subr.mxu0 0.0
    %157 = vmatpush1.msra.mxu0 %v67
    %158 = vmatprep.subr.mxu0 0.0
    %159 = vmatpush2.msra.mxu0 0.0
    %160 = vmatprep.subr.mxu0 0.0
    %161 = vmatpush2.msra.mxu0 0.0
    %162 = vmatprep.subr.mxu0 0.0
    %163 = vmatpush2.msra.mxu0 0.0
    %164 = vmatprep.subr.mxu0 0.0
    %165 = vmatpush2.msra.mxu0 0.0
    %166 = vmatprep.subr.mxu0 0.0
    %167 = vmatpush2.msra.mxu0 0.0
    %168 = vmatprep.subr.mxu0 0.0
    %169 = vmatpush2.msra.mxu0 0.0
    %170 = vmatprep.subr.mxu0 0.0
    %171 = vmatpush2.msra.mxu0 0.0
    %172 = vmatprep.subr.mxu0 0.0
    %173 = vmatpush2.msra.mxu0 0.0
    %174 = vmatprep.subr.mxu0 0.0
    %175 = vmatpush2.msra.mxu0 0.0
    %176 = vmatprep.subr.mxu0 0.0
    %177 = vmatpush2.msra.mxu0 0.0
    %178 = vmatprep.subr.mxu0 0.0
    %179 = vmatpush2.msra.mxu0 0.0
    %180 = vmatprep.subr.mxu0 0.0
    %181 = vmatpush2.msra.mxu0 0.0
    %182 = vmatprep.subr.mxu0 0.0
    %183 = vmatpush2.msra.mxu0 0.0
    %184 = vmatprep.subr.mxu0 0.0
    %185 = vmatpush2.msra.mxu0 0.0
    %186 = vmatprep.subr.mxu0 0.0
    %187 = vmatpush2.msra.mxu0 0.0
    %188 = vmatprep.subr.mxu0 0.0
    %189 = vmatpush2.msra.mxu0 0.0
    %190 = vmatprep.mubr.f32.mxu0 0.0
    %191 = vmatmul.mubr.f32.gmra.mxu0 %v79
    %v192 = vpop.f32.mrf.mxu0
    %v193 = vadd.f32 %v75, %v192
    %v194 = vpop.f32.mrf.mxu0
    %195 = vmatprep.mubr.f32.mxu0 0.0
    %196 = vmatmul.mubr.f32.gmra.mxu0 %v82
    %v197 = vpop.f32.mrf.mxu0
    %v198 = vadd.f32 %v75, %v197
    %v199 = vpop.f32.mrf.mxu0
    %200 = vmatprep.mubr.f32.mxu0 0.0
    %201 = vmatmul.mubr.f32.gmra.mxu0 %v85
    %v202 = vpop.f32.mrf.mxu0
    %v203 = vadd.f32 %v75, %v202
    %v204 = vpop.f32.mrf.mxu0
    %205 = vmatprep.mubr.f32.mxu0 0.0
    %206 = vmatmul.mubr.f32.gmra.mxu0 %v88
    %v207 = vpop.f32.mrf.mxu0
    %v208 = vadd.f32 %v75, %v207
    %v209 = vpop.f32.mrf.mxu0
    %210 = vmatprep.mubr.f32.mxu0 0.0
    %211 = vmatmul.mubr.f32.gmra.mxu0 %v91
    %v212 = vpop.f32.mrf.mxu0
    %v213 = vadd.f32 %v75, %v212
    %v214 = vpop.f32.mrf.mxu0
    %215 = vmatprep.mubr.f32.mxu0 0.0
    %216 = vmatmul.mubr.f32.gmra.mxu0 %v94
    %v217 = vpop.f32.mrf.mxu0
    %v218 = vadd.f32 %v75, %v217
    %v219 = vpop.f32.mrf.mxu0
    %220 = vmatprep.mubr.f32.mxu0 0.0
    %221 = vmatmul.mubr.f32.gmra.mxu0 %v97
    %v222 = vpop.f32.mrf.mxu0
    %v223 = vadd.f32 %v75, %v222
    %v224 = vpop.f32.mrf.mxu0
    %225 = vmatprep.mubr.f32.mxu0 0.0
    %226 = vmatmul.mubr.f32.gmra.mxu0 %v100
    %v227 = vpop.f32.mrf.mxu0
    %v228 = vadd.f32 %v75, %v227
    %v229 = vpop.f32.mrf.mxu0
    %230 = vmatprep.mubr.f32.mxu0 0.0
    %231 = vmatmul.mubr.f32.gmra.mxu0 %v103
    %v232 = vpop.f32.mrf.mxu0
    %v233 = vadd.f32 %v75, %v232
    %v234 = vpop.f32.mrf.mxu0
    %235 = vmatprep.mubr.f32.mxu0 0.0
    %236 = vmatmul.mubr.f32.gmra.mxu0 %v106
    %v237 = vpop.f32.mrf.mxu0
    %v238 = vadd.f32 %v75, %v237
    %v239 = vpop.f32.mrf.mxu0
    %240 = vmatprep.mubr.f32.mxu0 0.0
    %241 = vmatmul.mubr.f32.gmra.mxu0 %v109
    %v242 = vpop.f32.mrf.mxu0
    %v243 = vadd.f32 %v75, %v242
    %v244 = vpop.f32.mrf.mxu0
    %245 = vmatprep.mubr.f32.mxu0 0.0
    %246 = vmatmul.mubr.f32.gmra.mxu0 %v112
    %v247 = vpop.f32.mrf.mxu0
    %v248 = vadd.f32 %v75, %v247
    %v249 = vpop.f32.mrf.mxu0
    %250 = vmatprep.mubr.f32.mxu0 0.0
    %251 = vmatmul.mubr.f32.gmra.mxu0 %v115
    %v252 = vpop.f32.mrf.mxu0
    %v253 = vadd.f32 %v75, %v252
    %v254 = vpop.f32.mrf.mxu0
    %255 = vmatprep.mubr.f32.mxu0 0.0
    %256 = vmatmul.mubr.f32.gmra.mxu0 %v118
    %v257 = vpop.f32.mrf.mxu0
    %v258 = vadd.f32 %v75, %v257
    %v259 = vpop.f32.mrf.mxu0
    %260 = vmatprep.mubr.f32.mxu0 0.0
    %261 = vmatmul.mubr.f32.gmra.mxu0 %v121
    %v262 = vpop.f32.mrf.mxu0
    %v263 = vadd.f32 %v75, %v262
    %v264 = vpop.f32.mrf.mxu0
    %265 = vmatprep.mubr.f32.mxu0 0.0
    %266 = vmatmul.mubr.f32.gmra.mxu0 %v124
    %v267 = vpop.f32.mrf.mxu0
    %v268 = vadd.f32 %v75, %v267
    %v269 = vpop.f32.mrf.mxu0
    %270 = vdwg.mxu0
    %v271 = vmax.f32 %v193, 0.0
    %v272 = vmax.f32 %v198, 0.0
    %v273 = vmax.f32 %v203, 0.0
    %v274 = vmax.f32 %v208, 0.0
    %v275 = vmax.f32 %v213, 0.0
    %v276 = vmax.f32 %v218, 0.0
    %v277 = vmax.f32 %v223, 0.0
    %v278 = vmax.f32 %v228, 0.0
    %v279 = vmax.f32 %v233, 0.0
    %v280 = vmax.f32 %v238, 0.0
    %v281 = vmax.f32 %v243, 0.0
    %v282 = vmax.f32 %v248, 0.0
    %v283 = vmax.f32 %v253, 0.0
    %v284 = vmax.f32 %v258, 0.0
    %v285 = vmax.f32 %v263, 0.0
    %v286 = vmax.f32 %v268, 0.0
    %v287 = vld [vmem:[%s7] sm:$0xff]
    %v288 = vld [vmem:[%s7 + $0x8] sm:$0xff]
    %v289 = vld [vmem:[%s7 + $0x10] sm:$0xff]
    %v290 = vld [vmem:[%s7 + $0x18] sm:$0xff]
    %v291 = vld [vmem:[%s8] sm:$0x1]
    %v293 = vlaneseq
    %v294 = vshrl.u32 %v293, 7
    %v295 = vsub.s32 0, %v294
    %v296 = vrot.slane %v291, %v295
    %vm298 = vcmask 261120
    %v300 = vsel %vm298, %v271, 0
    %v303 = vsel %vm298, %v272, 0
    %v306 = vsel %vm298, %v273, 0
    %v309 = vsel %vm298, %v274, 0
    %v312 = vsel %vm298, %v275, 0
    %v315 = vsel %vm298, %v276, 0
    %v318 = vsel %vm298, %v277, 0
    %v321 = vsel %vm298, %v278, 0
    %v324 = vsel %vm298, %v279, 0
    %v327 = vsel %vm298, %v280, 0
    %v330 = vsel %vm298, %v281, 0
    %v333 = vsel %vm298, %v282, 0
    %v336 = vsel %vm298, %v283, 0
    %v339 = vsel %vm298, %v284, 0
    %v342 = vsel %vm298, %v285, 0
    %v345 = vsel %vm298, %v286, 0
    %347 = vmatprep.subr.mxu0 0.0
    %348 = vmatpush1.msra.mxu0 0.0
    %349 = vmatprep.subr.mxu0 0.0
    %350 = vmatpush1.msra.mxu0 0.0
    %351 = vmatprep.subr.mxu0 0.0
    %352 = vmatpush1.msra.mxu0 0.0
    %353 = vmatprep.subr.mxu0 0.0
    %354 = vmatpush1.msra.mxu0 0.0
    %355 = vmatprep.subr.mxu0 0.0
    %356 = vmatpush1.msra.mxu0 0.0
    %357 = vmatprep.subr.mxu0 0.0
    %358 = vmatpush1.msra.mxu0 0.0
    %359 = vmatprep.subr.mxu0 0.0
    %360 = vmatpush1.msra.mxu0 0.0
    %361 = vmatprep.subr.mxu0 0.0
    %362 = vmatpush1.msra.mxu0 0.0
    %363 = vmatprep.subr.mxu0 0.0
    %364 = vmatpush1.msra.mxu0 0.0
    %365 = vmatprep.subr.mxu0 0.0
    %366 = vmatpush1.msra.mxu0 0.0
    %367 = vmatprep.subr.mxu0 0.0
    %368 = vmatpush1.msra.mxu0 0.0
    %369 = vmatprep.subr.mxu0 0.0
    %370 = vmatpush1.msra.mxu0 0.0
    %371 = vmatprep.subr.mxu0 0.0
    %372 = vmatpush1.msra.mxu0 %v290
    %373 = vmatprep.subr.mxu0 0.0
    %374 = vmatpush1.msra.mxu0 %v289
    %375 = vmatprep.subr.mxu0 0.0
    %376 = vmatpush1.msra.mxu0 %v288
    %377 = vmatprep.subr.mxu0 0.0
    %378 = vmatpush1.msra.mxu0 %v287
    %379 = vmatprep.subr.mxu0 0.0
    %380 = vmatpush2.msra.mxu0 0.0
    %381 = vmatprep.subr.mxu0 0.0
    %382 = vmatpush2.msra.mxu0 0.0
    %383 = vmatprep.subr.mxu0 0.0
    %384 = vmatpush2.msra.mxu0 0.0
    %385 = vmatprep.subr.mxu0 0.0
    %386 = vmatpush2.msra.mxu0 0.0
    %387 = vmatprep.subr.mxu0 0.0
    %388 = vmatpush2.msra.mxu0 0.0
    %389 = vmatprep.subr.mxu0 0.0
    %390 = vmatpush2.msra.mxu0 0.0
    %391 = vmatprep.subr.mxu0 0.0
    %392 = vmatpush2.msra.mxu0 0.0
    %393 = vmatprep.subr.mxu0 0.0
    %394 = vmatpush2.msra.mxu0 0.0
    %395 = vmatprep.subr.mxu0 0.0
    %396 = vmatpush2.msra.mxu0 0.0
    %397 = vmatprep.subr.mxu0 0.0
    %398 = vmatpush2.msra.mxu0 0.0
    %399 = vmatprep.subr.mxu0 0.0
    %400 = vmatpush2.msra.mxu0 0.0
    %401 = vmatprep.subr.mxu0 0.0
    %402 = vmatpush2.msra.mxu0 0.0
    %403 = vmatprep.subr.mxu0 0.0
    %404 = vmatpush2.msra.mxu0 0.0
    %405 = vmatprep.subr.mxu0 0.0
    %406 = vmatpush2.msra.mxu0 0.0
    %407 = vmatprep.subr.mxu0 0.0
    %408 = vmatpush2.msra.mxu0 0.0
    %409 = vmatprep.subr.mxu0 0.0
    %410 = vmatpush2.msra.mxu0 0.0
    %411 = vmatprep.mubr.f32.mxu0 0.0
    %412 = vmatmul.mubr.f32.gmra.mxu0 %v300
    %v413 = vpop.f32.mrf.mxu0
    %v414 = vadd.f32 %v296, %v413
    %v415 = vpop.f32.mrf.mxu0
    %416 = vmatprep.mubr.f32.mxu0 0.0
    %417 = vmatmul.mubr.f32.gmra.mxu0 %v303
    %v418 = vpop.f32.mrf.mxu0
    %v419 = vadd.f32 %v296, %v418
    %v420 = vpop.f32.mrf.mxu0
    %421 = vmatprep.mubr.f32.mxu0 0.0
    %422 = vmatmul.mubr.f32.gmra.mxu0 %v306
    %v423 = vpop.f32.mrf.mxu0
    %v424 = vadd.f32 %v296, %v423
    %v425 = vpop.f32.mrf.mxu0
    %426 = vmatprep.mubr.f32.mxu0 0.0
    %427 = vmatmul.mubr.f32.gmra.mxu0 %v309
    %v428 = vpop.f32.mrf.mxu0
    %v429 = vadd.f32 %v296, %v428
    %v430 = vpop.f32.mrf.mxu0
    %431 = vmatprep.mubr.f32.mxu0 0.0
    %432 = vmatmul.mubr.f32.gmra.mxu0 %v312
    %v433 = vpop.f32.mrf.mxu0
    %v434 = vadd.f32 %v296, %v433
    %v435 = vpop.f32.mrf.mxu0
    %436 = vmatprep.mubr.f32.mxu0 0.0
    %437 = vmatmul.mubr.f32.gmra.mxu0 %v315
    %v438 = vpop.f32.mrf.mxu0
    %v439 = vadd.f32 %v296, %v438
    %v440 = vpop.f32.mrf.mxu0
    %441 = vmatprep.mubr.f32.mxu0 0.0
    %442 = vmatmul.mubr.f32.gmra.mxu0 %v318
    %v443 = vpop.f32.mrf.mxu0
    %v444 = vadd.f32 %v296, %v443
    %v445 = vpop.f32.mrf.mxu0
    %446 = vmatprep.mubr.f32.mxu0 0.0
    %447 = vmatmul.mubr.f32.gmra.mxu0 %v321
    %v448 = vpop.f32.mrf.mxu0
    %v449 = vadd.f32 %v296, %v448
    %v450 = vpop.f32.mrf.mxu0
    %451 = vmatprep.mubr.f32.mxu0 0.0
    %452 = vmatmul.mubr.f32.gmra.mxu0 %v324
    %v453 = vpop.f32.mrf.mxu0
    %v454 = vadd.f32 %v296, %v453
    %v455 = vpop.f32.mrf.mxu0
    %456 = vmatprep.mubr.f32.mxu0 0.0
    %457 = vmatmul.mubr.f32.gmra.mxu0 %v327
    %v458 = vpop.f32.mrf.mxu0
    %v459 = vadd.f32 %v296, %v458
    %v460 = vpop.f32.mrf.mxu0
    %461 = vmatprep.mubr.f32.mxu0 0.0
    %462 = vmatmul.mubr.f32.gmra.mxu0 %v330
    %v463 = vpop.f32.mrf.mxu0
    %v464 = vadd.f32 %v296, %v463
    %v465 = vpop.f32.mrf.mxu0
    %466 = vmatprep.mubr.f32.mxu0 0.0
    %467 = vmatmul.mubr.f32.gmra.mxu0 %v333
    %v468 = vpop.f32.mrf.mxu0
    %v469 = vadd.f32 %v296, %v468
    %v470 = vpop.f32.mrf.mxu0
    %471 = vmatprep.mubr.f32.mxu0 0.0
    %472 = vmatmul.mubr.f32.gmra.mxu0 %v336
    %v473 = vpop.f32.mrf.mxu0
    %v474 = vadd.f32 %v296, %v473
    %v475 = vpop.f32.mrf.mxu0
    %476 = vmatprep.mubr.f32.mxu0 0.0
    %477 = vmatmul.mubr.f32.gmra.mxu0 %v339
    %v478 = vpop.f32.mrf.mxu0
    %v479 = vadd.f32 %v296, %v478
    %v480 = vpop.f32.mrf.mxu0
    %481 = vmatprep.mubr.f32.mxu0 0.0
    %482 = vmatmul.mubr.f32.gmra.mxu0 %v342
    %v483 = vpop.f32.mrf.mxu0
    %v484 = vadd.f32 %v296, %v483
    %v485 = vpop.f32.mrf.mxu0
    %486 = vmatprep.mubr.f32.mxu0 0.0
    %487 = vmatmul.mubr.f32.gmra.mxu0 %v345
    %v488 = vpop.f32.mrf.mxu0
    %v489 = vadd.f32 %v296, %v488
    %v490 = vpop.f32.mrf.mxu0
    %491 = vdwg.mxu0
    %v492 = vld [vmem:[%s3] sm:$0xff]
    %v493 = vld [vmem:[%s3 + $0x8] sm:$0xff]
    %494 = vmatprep.subr.mxu0 0.0
    %495 = vmatpush1.msra.mxu0 %v489
    %496 = vmatprep.subr.mxu0 0.0
    %497 = vmatpush1.msra.mxu0 %v484
    %498 = vmatprep.subr.mxu0 0.0
    %499 = vmatpush1.msra.mxu0 %v479
    %500 = vmatprep.subr.mxu0 0.0
    %501 = vmatpush1.msra.mxu0 %v474
    %502 = vmatprep.subr.mxu0 0.0
    %503 = vmatpush1.msra.mxu0 %v469
    %504 = vmatprep.subr.mxu0 0.0
    %505 = vmatpush1.msra.mxu0 %v464
    %506 = vmatprep.subr.mxu0 0.0
    %507 = vmatpush1.msra.mxu0 %v459
    %508 = vmatprep.subr.mxu0 0.0
    %509 = vmatpush1.msra.mxu0 %v454
    %510 = vmatprep.subr.mxu0 0.0
    %511 = vmatpush1.msra.mxu0 %v449
    %512 = vmatprep.subr.mxu0 0.0
    %513 = vmatpush1.msra.mxu0 %v444
    %514 = vmatprep.subr.mxu0 0.0
    %515 = vmatpush1.msra.mxu0 %v439
    %516 = vmatprep.subr.mxu0 0.0
    %517 = vmatpush1.msra.mxu0 %v434
    %518 = vmatprep.subr.mxu0 0.0
    %519 = vmatpush1.msra.mxu0 %v429
    %520 = vmatprep.subr.mxu0 0.0
    %521 = vmatpush1.msra.mxu0 %v424
    %522 = vmatprep.subr.mxu0 0.0
    %523 = vmatpush1.msra.mxu0 %v419
    %524 = vmatprep.subr.mxu0 0.0
    %525 = vmatpush1.msra.mxu0 %v414
    %526 = vmatprep.subr.mxu0 0.0
    %527 = vmatpush2.msra.mxu0 0.0
    %528 = vmatprep.subr.mxu0 0.0
    %529 = vmatpush2.msra.mxu0 0.0
    %530 = vmatprep.subr.mxu0 0.0
    %531 = vmatpush2.msra.mxu0 0.0
    %532 = vmatprep.subr.mxu0 0.0
    %533 = vmatpush2.msra.mxu0 0.0
    %534 = vmatprep.subr.mxu0 0.0
    %535 = vmatpush2.msra.mxu0 0.0
    %536 = vmatprep.subr.mxu0 0.0
    %537 = vmatpush2.msra.mxu0 0.0
    %538 = vmatprep.subr.mxu0 0.0
    %539 = vmatpush2.msra.mxu0 0.0
    %540 = vmatprep.subr.mxu0 0.0
    %541 = vmatpush2.msra.mxu0 0.0
    %542 = vmatprep.subr.mxu0 0.0
    %543 = vmatpush2.msra.mxu0 0.0
    %544 = vmatprep.subr.mxu0 0.0
    %545 = vmatpush2.msra.mxu0 0.0
    %546 = vmatprep.subr.mxu0 0.0
    %547 = vmatpush2.msra.mxu0 0.0
    %548 = vmatprep.subr.mxu0 0.0
    %549 = vmatpush2.msra.mxu0 0.0
    %550 = vmatprep.subr.mxu0 0.0
    %551 = vmatpush2.msra.mxu0 0.0
    %552 = vmatprep.subr.mxu0 0.0
    %553 = vmatpush2.msra.mxu0 0.0
    %554 = vmatprep.subr.mxu0 0.0
    %555 = vmatpush2.msra.mxu0 0.0
    %556 = vmatprep.subr.mxu0 0.0
    %557 = vmatpush2.msra.mxu0 0.0
    %558 = vmatprep.mubr.f32.mxu0 0.0
    %559 = vmatmul.mubr.f32.gmra.mxu0 %v492
    %v560 = vpop.f32.mrf.mxu0
    %v561 = vadd.f32 0.0, %v560
    %v562 = vpop.f32.mrf.mxu0
    %563 = vmatprep.mubr.f32.mxu0 0.0
    %564 = vmatmul.mubr.f32.gmra.mxu0 %v493
    %v565 = vpop.f32.mrf.mxu0
    %v566 = vadd.f32 0.0, %v565
    %v567 = vpop.f32.mrf.mxu0
    %568 = vdwg.mxu0
    %v569 = vld [vmem:[%s10] sm:$0xff]
    %v570 = vld [vmem:[%s10 + $0x8] sm:$0xff]
    %v571 = vld [vmem:[%s10 + $0x10] sm:$0xff]
    %v572 = vld [vmem:[%s10 + $0x18] sm:$0xff]
    %v573 = vld [vmem:[%s11] sm:$0x1]
    %v575 = vlaneseq
    %v576 = vshrl.u32 %v575, 7
    %v577 = vsub.s32 0, %v576
    %v578 = vrot.slane %v573, %v577
    %v581 = vsel %vm298, %v561, 0
    %v584 = vsel %vm298, %v566, 0
    %586 = vmatprep.subr.mxu0 0.0
    %587 = vmatpush1.msra.mxu0 0.0
    %588 = vmatprep.subr.mxu0 0.0
    %589 = vmatpush1.msra.mxu0 0.0
    %590 = vmatprep.subr.mxu0 0.0
    %591 = vmatpush1.msra.mxu0 0.0
    %592 = vmatprep.subr.mxu0 0.0
    %593 = vmatpush1.msra.mxu0 0.0
    %594 = vmatprep.subr.mxu0 0.0
    %595 = vmatpush1.msra.mxu0 0.0
    %596 = vmatprep.subr.mxu0 0.0
    %597 = vmatpush1.msra.mxu0 0.0
    %598 = vmatprep.subr.mxu0 0.0
    %599 = vmatpush1.msra.mxu0 0.0
    %600 = vmatprep.subr.mxu0 0.0
    %601 = vmatpush1.msra.mxu0 0.0
    %602 = vmatprep.subr.mxu0 0.0
    %603 = vmatpush1.msra.mxu0 0.0
    %604 = vmatprep.subr.mxu0 0.0
    %605 = vmatpush1.msra.mxu0 0.0
    %606 = vmatprep.subr.mxu0 0.0
    %607 = vmatpush1.msra.mxu0 0.0
    %608 = vmatprep.subr.mxu0 0.0
    %609 = vmatpush1.msra.mxu0 0.0
    %610 = vmatprep.subr.mxu0 0.0
    %611 = vmatpush1.msra.mxu0 %v572
    %612 = vmatprep.subr.mxu0 0.0
    %613 = vmatpush1.msra.mxu0 %v571
    %614 = vmatprep.subr.mxu0 0.0
    %615 = vmatpush1.msra.mxu0 %v570
    %616 = vmatprep.subr.mxu0 0.0
    %617 = vmatpush1.msra.mxu0 %v569
    %618 = vmatprep.subr.mxu0 0.0
    %619 = vmatpush2.msra.mxu0 0.0
    %620 = vmatprep.subr.mxu0 0.0
    %621 = vmatpush2.msra.mxu0 0.0
    %622 = vmatprep.subr.mxu0 0.0
    %623 = vmatpush2.msra.mxu0 0.0
    %624 = vmatprep.subr.mxu0 0.0
    %625 = vmatpush2.msra.mxu0 0.0
    %626 = vmatprep.subr.mxu0 0.0
    %627 = vmatpush2.msra.mxu0 0.0
    %628 = vmatprep.subr.mxu0 0.0
    %629 = vmatpush2.msra.mxu0 0.0
    %630 = vmatprep.subr.mxu0 0.0
    %631 = vmatpush2.msra.mxu0 0.0
    %632 = vmatprep.subr.mxu0 0.0
    %633 = vmatpush2.msra.mxu0 0.0
    %634 = vmatprep.subr.mxu0 0.0
    %635 = vmatpush2.msra.mxu0 0.0
    %636 = vmatprep.subr.mxu0 0.0
    %637 = vmatpush2.msra.mxu0 0.0
    %638 = vmatprep.subr.mxu0 0.0
    %639 = vmatpush2.msra.mxu0 0.0
    %640 = vmatprep.subr.mxu0 0.0
    %641 = vmatpush2.msra.mxu0 0.0
    %642 = vmatprep.subr.mxu0 0.0
    %643 = vmatpush2.msra.mxu0 0.0
    %644 = vmatprep.subr.mxu0 0.0
    %645 = vmatpush2.msra.mxu0 0.0
    %646 = vmatprep.subr.mxu0 0.0
    %647 = vmatpush2.msra.mxu0 0.0
    %648 = vmatprep.subr.mxu0 0.0
    %649 = vmatpush2.msra.mxu0 0.0
    %650 = vmatprep.mubr.f32.mxu0 0.0
    %651 = vmatmul.mubr.f32.gmra.mxu0 %v581
    %v652 = vpop.f32.mrf.mxu0
    %v653 = vadd.f32 %v578, %v652
    %v654 = vpop.f32.mrf.mxu0
    %655 = vmatprep.mubr.f32.mxu0 0.0
    %656 = vmatmul.mubr.f32.gmra.mxu0 %v584
    %v657 = vpop.f32.mrf.mxu0
    %v658 = vadd.f32 %v578, %v657
    %v659 = vpop.f32.mrf.mxu0
    %660 = vdwg.mxu0
    %v661 = vld [vmem:[%s1] sm:$0xff]
    %v662 = vld [vmem:[%s1 + $0x8] sm:$0xff]
    %v663 = vld [vmem:[%s1 + $0x10] sm:$0xff]
    %v664 = vld [vmem:[%s1 + $0x18] sm:$0xff]
    %v665 = vld [vmem:[%s1 + $0x20] sm:$0xff]
    %v666 = vld [vmem:[%s1 + $0x28] sm:$0xff]
    %v667 = vld [vmem:[%s1 + $0x30] sm:$0xff]
    %v668 = vld [vmem:[%s1 + $0x38] sm:$0xff]
    %v669 = vld [vmem:[%s1 + $0x40] sm:$0xff]
    %v670 = vld [vmem:[%s1 + $0x48] sm:$0xff]
    %v671 = vld [vmem:[%s1 + $0x50] sm:$0xff]
    %v672 = vld [vmem:[%s1 + $0x58] sm:$0xff]
    %v673 = vld [vmem:[%s1 + $0x60] sm:$0xff]
    %v674 = vld [vmem:[%s1 + $0x68] sm:$0xff]
    %v675 = vld [vmem:[%s1 + $0x70] sm:$0xff]
    %v676 = vld [vmem:[%s1 + $0x78] sm:$0xff]
    %v677 = vld [vmem:[%s9] sm:$0xff]
    %v678 = vld [vmem:[%s4] sm:$0xff]
    %v679 = vld [vmem:[%s4 + $0x8] sm:$0xff]
    %v680 = vld [vmem:[%s4 + $0x10] sm:$0xff]
    %v681 = vld [vmem:[%s4 + $0x18] sm:$0xff]
    %v682 = vld [vmem:[%s4 + $0x20] sm:$0xff]
    %v683 = vld [vmem:[%s4 + $0x28] sm:$0xff]
    %v684 = vld [vmem:[%s4 + $0x30] sm:$0xff]
    %v685 = vld [vmem:[%s4 + $0x38] sm:$0xff]
    %v686 = vld [vmem:[%s4 + $0x40] sm:$0xff]
    %v687 = vld [vmem:[%s4 + $0x48] sm:$0xff]
    %v688 = vld [vmem:[%s4 + $0x50] sm:$0xff]
    %v689 = vld [vmem:[%s4 + $0x58] sm:$0xff]
    %v690 = vld [vmem:[%s4 + $0x60] sm:$0xff]
    %v691 = vld [vmem:[%s4 + $0x68] sm:$0xff]
    %v692 = vld [vmem:[%s4 + $0x70] sm:$0xff]
    %v693 = vld [vmem:[%s4 + $0x78] sm:$0xff]
    %vm694 = vcmask 130048
    %v696 = vsel %vm694, %v678, 0
    %v699 = vsel %vm694, %v679, 0
    %v702 = vsel %vm694, %v680, 0
    %v705 = vsel %vm694, %v681, 0
    %v708 = vsel %vm694, %v682, 0
    %v711 = vsel %vm694, %v683, 0
    %v714 = vsel %vm694, %v684, 0
    %v717 = vsel %vm694, %v685, 0
    %v720 = vsel %vm694, %v686, 0
    %v723 = vsel %vm694, %v687, 0
    %v726 = vsel %vm694, %v688, 0
    %v729 = vsel %vm694, %v689, 0
    %v732 = vsel %vm694, %v690, 0
    %v735 = vsel %vm694, %v691, 0
    %v738 = vsel %vm694, %v692, 0
    %v741 = vsel %vm694, %v693, 0
    %743 = vmatprep.subr.mxu0 0.0
    %744 = vmatpush1.msra.mxu0 0.0
    %745 = vmatprep.subr.mxu0 0.0
    %746 = vmatpush1.msra.mxu0 0.0
    %747 = vmatprep.subr.mxu0 0.0
    %748 = vmatpush1.msra.mxu0 0.0
    %749 = vmatprep.subr.mxu0 0.0
    %750 = vmatpush1.msra.mxu0 0.0
    %751 = vmatprep.subr.mxu0 0.0
    %752 = vmatpush1.msra.mxu0 0.0
    %753 = vmatprep.subr.mxu0 0.0
    %754 = vmatpush1.msra.mxu0 0.0
    %755 = vmatprep.subr.mxu0 0.0
    %756 = vmatpush1.msra.mxu0 0.0
    %757 = vmatprep.subr.mxu0 0.0
    %758 = vmatpush1.msra.mxu0 0.0
    %759 = vmatprep.subr.mxu0 0.0
    %760 = vmatpush1.msra.mxu0 0.0
    %761 = vmatprep.subr.mxu0 0.0
    %762 = vmatpush1.msra.mxu0 0.0
    %763 = vmatprep.subr.mxu0 0.0
    %764 = vmatpush1.msra.mxu0 0.0
    %765 = vmatprep.subr.mxu0 0.0
    %766 = vmatpush1.msra.mxu0 0.0
    %767 = vmatprep.subr.mxu0 0.0
    %768 = vmatpush1.msra.mxu0 0.0
    %769 = vmatprep.subr.mxu0 0.0
    %770 = vmatpush1.msra.mxu0 0.0
    %771 = vmatprep.subr.mxu0 0.0
    %772 = vmatpush1.msra.mxu0 %v658
    %773 = vmatprep.subr.mxu0 0.0
    %774 = vmatpush1.msra.mxu0 %v653
    %775 = vmatprep.subr.mxu0 0.0
    %776 = vmatpush2.msra.mxu0 0.0
    %777 = vmatprep.subr.mxu0 0.0
    %778 = vmatpush2.msra.mxu0 0.0
    %779 = vmatprep.subr.mxu0 0.0
    %780 = vmatpush2.msra.mxu0 0.0
    %781 = vmatprep.subr.mxu0 0.0
    %782 = vmatpush2.msra.mxu0 0.0
    %783 = vmatprep.subr.mxu0 0.0
    %784 = vmatpush2.msra.mxu0 0.0
    %785 = vmatprep.subr.mxu0 0.0
    %786 = vmatpush2.msra.mxu0 0.0
    %787 = vmatprep.subr.mxu0 0.0
    %788 = vmatpush2.msra.mxu0 0.0
    %789 = vmatprep.subr.mxu0 0.0
    %790 = vmatpush2.msra.mxu0 0.0
    %791 = vmatprep.subr.mxu0 0.0
    %792 = vmatpush2.msra.mxu0 0.0
    %793 = vmatprep.subr.mxu0 0.0
    %794 = vmatpush2.msra.mxu0 0.0
    %795 = vmatprep.subr.mxu0 0.0
    %796 = vmatpush2.msra.mxu0 0.0
    %797 = vmatprep.subr.mxu0 0.0
    %798 = vmatpush2.msra.mxu0 0.0
    %799 = vmatprep.subr.mxu0 0.0
    %800 = vmatpush2.msra.mxu0 0.0
    %801 = vmatprep.subr.mxu0 0.0
    %802 = vmatpush2.msra.mxu0 0.0
    %803 = vmatprep.subr.mxu0 0.0
    %804 = vmatpush2.msra.mxu0 0.0
    %805 = vmatprep.subr.mxu0 0.0
    %806 = vmatpush2.msra.mxu0 0.0
    %807 = vmatprep.mubr.f32.mxu0 0.0
    %808 = vmatmul.mubr.f32.gmra.mxu0 %v696
    %v809 = vpop.f32.mrf.mxu0
    %v810 = vadd.f32 0.0, %v809
    %v811 = vpop.f32.mrf.mxu0
    %812 = vmatprep.mubr.f32.mxu0 0.0
    %813 = vmatmul.mubr.f32.gmra.mxu0 %v699
    %v814 = vpop.f32.mrf.mxu0
    %v815 = vadd.f32 0.0, %v814
    %v816 = vpop.f32.mrf.mxu0
    %817 = vmatprep.mubr.f32.mxu0 0.0
    %818 = vmatmul.mubr.f32.gmra.mxu0 %v702
    %v819 = vpop.f32.mrf.mxu0
    %v820 = vadd.f32 0.0, %v819
    %v821 = vpop.f32.mrf.mxu0
    %822 = vmatprep.mubr.f32.mxu0 0.0
    %823 = vmatmul.mubr.f32.gmra.mxu0 %v705
    %v824 = vpop.f32.mrf.mxu0
    %v825 = vadd.f32 0.0, %v824
    %v826 = vpop.f32.mrf.mxu0
    %827 = vmatprep.mubr.f32.mxu0 0.0
    %828 = vmatmul.mubr.f32.gmra.mxu0 %v708
    %v829 = vpop.f32.mrf.mxu0
    %v830 = vadd.f32 0.0, %v829
    %v831 = vpop.f32.mrf.mxu0
    %832 = vmatprep.mubr.f32.mxu0 0.0
    %833 = vmatmul.mubr.f32.gmra.mxu0 %v711
    %v834 = vpop.f32.mrf.mxu0
    %v835 = vadd.f32 0.0, %v834
    %v836 = vpop.f32.mrf.mxu0
    %837 = vmatprep.mubr.f32.mxu0 0.0
    %838 = vmatmul.mubr.f32.gmra.mxu0 %v714
    %v839 = vpop.f32.mrf.mxu0
    %v840 = vadd.f32 0.0, %v839
    %v841 = vpop.f32.mrf.mxu0
    %842 = vmatprep.mubr.f32.mxu0 0.0
    %843 = vmatmul.mubr.f32.gmra.mxu0 %v717
    %v844 = vpop.f32.mrf.mxu0
    %v845 = vadd.f32 0.0, %v844
    %v846 = vpop.f32.mrf.mxu0
    %847 = vmatprep.mubr.f32.mxu0 0.0
    %848 = vmatmul.mubr.f32.gmra.mxu0 %v720
    %v849 = vpop.f32.mrf.mxu0
    %v850 = vadd.f32 0.0, %v849
    %v851 = vpop.f32.mrf.mxu0
    %852 = vmatprep.mubr.f32.mxu0 0.0
    %853 = vmatmul.mubr.f32.gmra.mxu0 %v723
    %v854 = vpop.f32.mrf.mxu0
    %v855 = vadd.f32 0.0, %v854
    %v856 = vpop.f32.mrf.mxu0
    %857 = vmatprep.mubr.f32.mxu0 0.0
    %858 = vmatmul.mubr.f32.gmra.mxu0 %v726
    %v859 = vpop.f32.mrf.mxu0
    %v860 = vadd.f32 0.0, %v859
    %v861 = vpop.f32.mrf.mxu0
    %862 = vmatprep.mubr.f32.mxu0 0.0
    %863 = vmatmul.mubr.f32.gmra.mxu0 %v729
    %v864 = vpop.f32.mrf.mxu0
    %v865 = vadd.f32 0.0, %v864
    %v866 = vpop.f32.mrf.mxu0
    %867 = vmatprep.mubr.f32.mxu0 0.0
    %868 = vmatmul.mubr.f32.gmra.mxu0 %v732
    %v869 = vpop.f32.mrf.mxu0
    %v870 = vadd.f32 0.0, %v869
    %v871 = vpop.f32.mrf.mxu0
    %872 = vmatprep.mubr.f32.mxu0 0.0
    %873 = vmatmul.mubr.f32.gmra.mxu0 %v735
    %v874 = vpop.f32.mrf.mxu0
    %v875 = vadd.f32 0.0, %v874
    %v876 = vpop.f32.mrf.mxu0
    %877 = vmatprep.mubr.f32.mxu0 0.0
    %878 = vmatmul.mubr.f32.gmra.mxu0 %v738
    %v879 = vpop.f32.mrf.mxu0
    %v880 = vadd.f32 0.0, %v879
    %v881 = vpop.f32.mrf.mxu0
    %882 = vmatprep.mubr.f32.mxu0 0.0
    %883 = vmatmul.mubr.f32.gmra.mxu0 %v741
    %v884 = vpop.f32.mrf.mxu0
    %v885 = vadd.f32 0.0, %v884
    %v886 = vpop.f32.mrf.mxu0
    %887 = vdwg.mxu0
    %vm888 = vcmask 64512
    %v890 = vsel %vm888, %v661, 0
    %v893 = vsel %vm888, %v662, 0
    %v896 = vsel %vm888, %v663, 0
    %v899 = vsel %vm888, %v664, 0
    %v902 = vsel %vm888, %v665, 0
    %v905 = vsel %vm888, %v666, 0
    %v908 = vsel %vm888, %v667, 0
    %v911 = vsel %vm888, %v668, 0
    %v914 = vsel %vm888, %v669, 0
    %v917 = vsel %vm888, %v670, 0
    %v920 = vsel %vm888, %v671, 0
    %v923 = vsel %vm888, %v672, 0
    %v926 = vsel %vm888, %v673, 0
    %v929 = vsel %vm888, %v674, 0
    %v932 = vsel %vm888, %v675, 0
    %v935 = vsel %vm888, %v676, 0
    %937 = vmatprep.subr.mxu0 0.0
    %938 = vmatpush1.msra.mxu0 0.0
    %939 = vmatprep.subr.mxu0 0.0
    %940 = vmatpush1.msra.mxu0 0.0
    %941 = vmatprep.subr.mxu0 0.0
    %942 = vmatpush1.msra.mxu0 0.0
    %943 = vmatprep.subr.mxu0 0.0
    %944 = vmatpush1.msra.mxu0 0.0
    %945 = vmatprep.subr.mxu0 0.0
    %946 = vmatpush1.msra.mxu0 0.0
    %947 = vmatprep.subr.mxu0 0.0
    %948 = vmatpush1.msra.mxu0 0.0
    %949 = vmatprep.subr.mxu0 0.0
    %950 = vmatpush1.msra.mxu0 0.0
    %951 = vmatprep.subr.mxu0 0.0
    %952 = vmatpush1.msra.mxu0 0.0
    %953 = vmatprep.subr.mxu0 0.0
    %954 = vmatpush1.msra.mxu0 0.0
    %955 = vmatprep.subr.mxu0 0.0
    %956 = vmatpush1.msra.mxu0 0.0
    %957 = vmatprep.subr.mxu0 0.0
    %958 = vmatpush1.msra.mxu0 0.0
    %959 = vmatprep.subr.mxu0 0.0
    %960 = vmatpush1.msra.mxu0 0.0
    %961 = vmatprep.subr.mxu0 0.0
    %962 = vmatpush1.msra.mxu0 0.0
    %963 = vmatprep.subr.mxu0 0.0
    %964 = vmatpush1.msra.mxu0 0.0
    %965 = vmatprep.subr.mxu0 0.0
    %966 = vmatpush1.msra.mxu0 0.0
    %967 = vmatprep.subr.mxu0 0.0
    %968 = vmatpush1.msra.mxu0 %v677
    %969 = vmatprep.subr.mxu0 0.0
    %970 = vmatpush2.msra.mxu0 0.0
    %971 = vmatprep.subr.mxu0 0.0
    %972 = vmatpush2.msra.mxu0 0.0
    %973 = vmatprep.subr.mxu0 0.0
    %974 = vmatpush2.msra.mxu0 0.0
    %975 = vmatprep.subr.mxu0 0.0
    %976 = vmatpush2.msra.mxu0 0.0
    %977 = vmatprep.subr.mxu0 0.0
    %978 = vmatpush2.msra.mxu0 0.0
    %979 = vmatprep.subr.mxu0 0.0
    %980 = vmatpush2.msra.mxu0 0.0
    %981 = vmatprep.subr.mxu0 0.0
    %982 = vmatpush2.msra.mxu0 0.0
    %983 = vmatprep.subr.mxu0 0.0
    %984 = vmatpush2.msra.mxu0 0.0
    %985 = vmatprep.subr.mxu0 0.0
    %986 = vmatpush2.msra.mxu0 0.0
    %987 = vmatprep.subr.mxu0 0.0
    %988 = vmatpush2.msra.mxu0 0.0
    %989 = vmatprep.subr.mxu0 0.0
    %990 = vmatpush2.msra.mxu0 0.0
    %991 = vmatprep.subr.mxu0 0.0
    %992 = vmatpush2.msra.mxu0 0.0
    %993 = vmatprep.subr.mxu0 0.0
    %994 = vmatpush2.msra.mxu0 0.0
    %995 = vmatprep.subr.mxu0 0.0
    %996 = vmatpush2.msra.mxu0 0.0
    %997 = vmatprep.subr.mxu0 0.0
    %998 = vmatpush2.msra.mxu0 0.0
    %999 = vmatprep.subr.mxu0 0.0
    %1000 = vmatpush2.msra.mxu0 0.0
    %1001 = vmatprep.mubr.f32.mxu0 0.0
    %1002 = vmatmul.mubr.f32.gmra.mxu0 %v890
    %v1003 = vpop.f32.mrf.mxu0
    %v1004 = vadd.f32 %v810, %v1003
    %v1005 = vpop.f32.mrf.mxu0
    %1006 = vmatprep.mubr.f32.mxu0 0.0
    %1007 = vmatmul.mubr.f32.gmra.mxu0 %v893
    %v1008 = vpop.f32.mrf.mxu0
    %v1009 = vadd.f32 %v815, %v1008
    %v1010 = vpop.f32.mrf.mxu0
    %1011 = vmatprep.mubr.f32.mxu0 0.0
    %1012 = vmatmul.mubr.f32.gmra.mxu0 %v896
    %v1013 = vpop.f32.mrf.mxu0
    %v1014 = vadd.f32 %v820, %v1013
    %v1015 = vpop.f32.mrf.mxu0
    %1016 = vmatprep.mubr.f32.mxu0 0.0
    %1017 = vmatmul.mubr.f32.gmra.mxu0 %v899
    %v1018 = vpop.f32.mrf.mxu0
    %v1019 = vadd.f32 %v825, %v1018
    %v1020 = vpop.f32.mrf.mxu0
    %1021 = vmatprep.mubr.f32.mxu0 0.0
    %1022 = vmatmul.mubr.f32.gmra.mxu0 %v902
    %v1023 = vpop.f32.mrf.mxu0
    %v1024 = vadd.f32 %v830, %v1023
    %v1025 = vpop.f32.mrf.mxu0
    %1026 = vmatprep.mubr.f32.mxu0 0.0
    %1027 = vmatmul.mubr.f32.gmra.mxu0 %v905
    %v1028 = vpop.f32.mrf.mxu0
    %v1029 = vadd.f32 %v835, %v1028
    %v1030 = vpop.f32.mrf.mxu0
    %1031 = vmatprep.mubr.f32.mxu0 0.0
    %1032 = vmatmul.mubr.f32.gmra.mxu0 %v908
    %v1033 = vpop.f32.mrf.mxu0
    %v1034 = vadd.f32 %v840, %v1033
    %v1035 = vpop.f32.mrf.mxu0
    %1036 = vmatprep.mubr.f32.mxu0 0.0
    %1037 = vmatmul.mubr.f32.gmra.mxu0 %v911
    %v1038 = vpop.f32.mrf.mxu0
    %v1039 = vadd.f32 %v845, %v1038
    %v1040 = vpop.f32.mrf.mxu0
    %1041 = vmatprep.mubr.f32.mxu0 0.0
    %1042 = vmatmul.mubr.f32.gmra.mxu0 %v914
    %v1043 = vpop.f32.mrf.mxu0
    %v1044 = vadd.f32 %v850, %v1043
    %v1045 = vpop.f32.mrf.mxu0
    %1046 = vmatprep.mubr.f32.mxu0 0.0
    %1047 = vmatmul.mubr.f32.gmra.mxu0 %v917
    %v1048 = vpop.f32.mrf.mxu0
    %v1049 = vadd.f32 %v855, %v1048
    %v1050 = vpop.f32.mrf.mxu0
    %1051 = vmatprep.mubr.f32.mxu0 0.0
    %1052 = vmatmul.mubr.f32.gmra.mxu0 %v920
    %v1053 = vpop.f32.mrf.mxu0
    %v1054 = vadd.f32 %v860, %v1053
    %v1055 = vpop.f32.mrf.mxu0
    %1056 = vmatprep.mubr.f32.mxu0 0.0
    %1057 = vmatmul.mubr.f32.gmra.mxu0 %v923
    %v1058 = vpop.f32.mrf.mxu0
    %v1059 = vadd.f32 %v865, %v1058
    %v1060 = vpop.f32.mrf.mxu0
    %1061 = vmatprep.mubr.f32.mxu0 0.0
    %1062 = vmatmul.mubr.f32.gmra.mxu0 %v926
    %v1063 = vpop.f32.mrf.mxu0
    %v1064 = vadd.f32 %v870, %v1063
    %v1065 = vpop.f32.mrf.mxu0
    %1066 = vmatprep.mubr.f32.mxu0 0.0
    %1067 = vmatmul.mubr.f32.gmra.mxu0 %v929
    %v1068 = vpop.f32.mrf.mxu0
    %v1069 = vadd.f32 %v875, %v1068
    %v1070 = vpop.f32.mrf.mxu0
    %1071 = vmatprep.mubr.f32.mxu0 0.0
    %1072 = vmatmul.mubr.f32.gmra.mxu0 %v932
    %v1073 = vpop.f32.mrf.mxu0
    %v1074 = vadd.f32 %v880, %v1073
    %v1075 = vpop.f32.mrf.mxu0
    %1076 = vmatprep.mubr.f32.mxu0 0.0
    %1077 = vmatmul.mubr.f32.gmra.mxu0 %v935
    %v1078 = vpop.f32.mrf.mxu0
    %v1079 = vadd.f32 %v885, %v1078
    %v1080 = vpop.f32.mrf.mxu0
    %1081 = vdwg.mxu0
    %v1082 = vmax.f32 %v1004, 0.0
    %v1083 = vmax.f32 %v1009, 0.0
    %v1084 = vmax.f32 %v1014, 0.0
    %v1085 = vmax.f32 %v1019, 0.0
    %v1086 = vmax.f32 %v1024, 0.0
    %v1087 = vmax.f32 %v1029, 0.0
    %v1088 = vmax.f32 %v1034, 0.0
    %v1089 = vmax.f32 %v1039, 0.0
    %v1090 = vmax.f32 %v1044, 0.0
    %v1091 = vmax.f32 %v1049, 0.0
    %v1092 = vmax.f32 %v1054, 0.0
    %v1093 = vmax.f32 %v1059, 0.0
    %v1094 = vmax.f32 %v1064, 0.0
    %v1095 = vmax.f32 %v1069, 0.0
    %v1096 = vmax.f32 %v1074, 0.0
    %v1097 = vmax.f32 %v1079, 0.0
    %v1098 = vld [vmem:[%s12] sm:$0xff]
    %v1099 = vld [vmem:[%s12 + $0x8] sm:$0xff]
    %v1100 = vld [vmem:[%s12 + $0x10] sm:$0xff]
    %v1101 = vld [vmem:[%s12 + $0x18] sm:$0xff]
    %v1102 = vld [vmem:[%s13] sm:$0x1]
    %v1104 = vlaneseq
    %v1105 = vshrl.u32 %v1104, 7
    %v1106 = vsub.s32 0, %v1105
    %v1107 = vrot.slane %v1102, %v1106
    %v1110 = vsel %vm298, %v1082, 0
    %v1113 = vsel %vm298, %v1083, 0
    %v1116 = vsel %vm298, %v1084, 0
    %v1119 = vsel %vm298, %v1085, 0
    %v1122 = vsel %vm298, %v1086, 0
    %v1125 = vsel %vm298, %v1087, 0
    %v1128 = vsel %vm298, %v1088, 0
    %v1131 = vsel %vm298, %v1089, 0
    %v1134 = vsel %vm298, %v1090, 0
    %v1137 = vsel %vm298, %v1091, 0
    %v1140 = vsel %vm298, %v1092, 0
    %v1143 = vsel %vm298, %v1093, 0
    %v1146 = vsel %vm298, %v1094, 0
    %v1149 = vsel %vm298, %v1095, 0
    %v1152 = vsel %vm298, %v1096, 0
    %v1155 = vsel %vm298, %v1097, 0
    %1157 = vmatprep.subr.mxu0 0.0
    %1158 = vmatpush1.msra.mxu0 0.0
    %1159 = vmatprep.subr.mxu0 0.0
    %1160 = vmatpush1.msra.mxu0 0.0
    %1161 = vmatprep.subr.mxu0 0.0
    %1162 = vmatpush1.msra.mxu0 0.0
    %1163 = vmatprep.subr.mxu0 0.0
    %1164 = vmatpush1.msra.mxu0 0.0
    %1165 = vmatprep.subr.mxu0 0.0
    %1166 = vmatpush1.msra.mxu0 0.0
    %1167 = vmatprep.subr.mxu0 0.0
    %1168 = vmatpush1.msra.mxu0 0.0
    %1169 = vmatprep.subr.mxu0 0.0
    %1170 = vmatpush1.msra.mxu0 0.0
    %1171 = vmatprep.subr.mxu0 0.0
    %1172 = vmatpush1.msra.mxu0 0.0
    %1173 = vmatprep.subr.mxu0 0.0
    %1174 = vmatpush1.msra.mxu0 0.0
    %1175 = vmatprep.subr.mxu0 0.0
    %1176 = vmatpush1.msra.mxu0 0.0
    %1177 = vmatprep.subr.mxu0 0.0
    %1178 = vmatpush1.msra.mxu0 0.0
    %1179 = vmatprep.subr.mxu0 0.0
    %1180 = vmatpush1.msra.mxu0 0.0
    %1181 = vmatprep.subr.mxu0 0.0
    %1182 = vmatpush1.msra.mxu0 %v1101
    %1183 = vmatprep.subr.mxu0 0.0
    %1184 = vmatpush1.msra.mxu0 %v1100
    %1185 = vmatprep.subr.mxu0 0.0
    %1186 = vmatpush1.msra.mxu0 %v1099
    %1187 = vmatprep.subr.mxu0 0.0
    %1188 = vmatpush1.msra.mxu0 %v1098
    %1189 = vmatprep.subr.mxu0 0.0
    %1190 = vmatpush2.msra.mxu0 0.0
    %1191 = vmatprep.subr.mxu0 0.0
    %1192 = vmatpush2.msra.mxu0 0.0
    %1193 = vmatprep.subr.mxu0 0.0
    %1194 = vmatpush2.msra.mxu0 0.0
    %1195 = vmatprep.subr.mxu0 0.0
    %1196 = vmatpush2.msra.mxu0 0.0
    %1197 = vmatprep.subr.mxu0 0.0
    %1198 = vmatpush2.msra.mxu0 0.0
    %1199 = vmatprep.subr.mxu0 0.0
    %1200 = vmatpush2.msra.mxu0 0.0
    %1201 = vmatprep.subr.mxu0 0.0
    %1202 = vmatpush2.msra.mxu0 0.0
    %1203 = vmatprep.subr.mxu0 0.0
    %1204 = vmatpush2.msra.mxu0 0.0
    %1205 = vmatprep.subr.mxu0 0.0
    %1206 = vmatpush2.msra.mxu0 0.0
    %1207 = vmatprep.subr.mxu0 0.0
    %1208 = vmatpush2.msra.mxu0 0.0
    %1209 = vmatprep.subr.mxu0 0.0
    %1210 = vmatpush2.msra.mxu0 0.0
    %1211 = vmatprep.subr.mxu0 0.0
    %1212 = vmatpush2.msra.mxu0 0.0
    %1213 = vmatprep.subr.mxu0 0.0
    %1214 = vmatpush2.msra.mxu0 0.0
    %1215 = vmatprep.subr.mxu0 0.0
    %1216 = vmatpush2.msra.mxu0 0.0
    %1217 = vmatprep.subr.mxu0 0.0
    %1218 = vmatpush2.msra.mxu0 0.0
    %1219 = vmatprep.subr.mxu0 0.0
    %1220 = vmatpush2.msra.mxu0 0.0
    %1221 = vmatprep.mubr.f32.mxu0 0.0
    %1222 = vmatmul.mubr.f32.gmra.mxu0 %v1110
    %v1223 = vpop.f32.mrf.mxu0
    %v1224 = vadd.f32 %v1107, %v1223
    %v1225 = vpop.f32.mrf.mxu0
    %1226 = vmatprep.mubr.f32.mxu0 0.0
    %1227 = vmatmul.mubr.f32.gmra.mxu0 %v1113
    %v1228 = vpop.f32.mrf.mxu0
    %v1229 = vadd.f32 %v1107, %v1228
    %v1230 = vpop.f32.mrf.mxu0
    %1231 = vmatprep.mubr.f32.mxu0 0.0
    %1232 = vmatmul.mubr.f32.gmra.mxu0 %v1116
    %v1233 = vpop.f32.mrf.mxu0
    %v1234 = vadd.f32 %v1107, %v1233
    %v1235 = vpop.f32.mrf.mxu0
    %1236 = vmatprep.mubr.f32.mxu0 0.0
    %1237 = vmatmul.mubr.f32.gmra.mxu0 %v1119
    %v1238 = vpop.f32.mrf.mxu0
    %v1239 = vadd.f32 %v1107, %v1238
    %v1240 = vpop.f32.mrf.mxu0
    %1241 = vmatprep.mubr.f32.mxu0 0.0
    %1242 = vmatmul.mubr.f32.gmra.mxu0 %v1122
    %v1243 = vpop.f32.mrf.mxu0
    %v1244 = vadd.f32 %v1107, %v1243
    %v1245 = vpop.f32.mrf.mxu0
    %1246 = vmatprep.mubr.f32.mxu0 0.0
    %1247 = vmatmul.mubr.f32.gmra.mxu0 %v1125
    %v1248 = vpop.f32.mrf.mxu0
    %v1249 = vadd.f32 %v1107, %v1248
    %v1250 = vpop.f32.mrf.mxu0
    %1251 = vmatprep.mubr.f32.mxu0 0.0
    %1252 = vmatmul.mubr.f32.gmra.mxu0 %v1128
    %v1253 = vpop.f32.mrf.mxu0
    %v1254 = vadd.f32 %v1107, %v1253
    %v1255 = vpop.f32.mrf.mxu0
    %1256 = vmatprep.mubr.f32.mxu0 0.0
    %1257 = vmatmul.mubr.f32.gmra.mxu0 %v1131
    %v1258 = vpop.f32.mrf.mxu0
    %v1259 = vadd.f32 %v1107, %v1258
    %v1260 = vpop.f32.mrf.mxu0
    %1261 = vmatprep.mubr.f32.mxu0 0.0
    %1262 = vmatmul.mubr.f32.gmra.mxu0 %v1134
    %v1263 = vpop.f32.mrf.mxu0
    %v1264 = vadd.f32 %v1107, %v1263
    %v1265 = vpop.f32.mrf.mxu0
    %1266 = vmatprep.mubr.f32.mxu0 0.0
    %1267 = vmatmul.mubr.f32.gmra.mxu0 %v1137
    %v1268 = vpop.f32.mrf.mxu0
    %v1269 = vadd.f32 %v1107, %v1268
    %v1270 = vpop.f32.mrf.mxu0
    %1271 = vmatprep.mubr.f32.mxu0 0.0
    %1272 = vmatmul.mubr.f32.gmra.mxu0 %v1140
    %v1273 = vpop.f32.mrf.mxu0
    %v1274 = vadd.f32 %v1107, %v1273
    %v1275 = vpop.f32.mrf.mxu0
    %1276 = vmatprep.mubr.f32.mxu0 0.0
    %1277 = vmatmul.mubr.f32.gmra.mxu0 %v1143
    %v1278 = vpop.f32.mrf.mxu0
    %v1279 = vadd.f32 %v1107, %v1278
    %v1280 = vpop.f32.mrf.mxu0
    %1281 = vmatprep.mubr.f32.mxu0 0.0
    %1282 = vmatmul.mubr.f32.gmra.mxu0 %v1146
    %v1283 = vpop.f32.mrf.mxu0
    %v1284 = vadd.f32 %v1107, %v1283
    %v1285 = vpop.f32.mrf.mxu0
    %1286 = vmatprep.mubr.f32.mxu0 0.0
    %1287 = vmatmul.mubr.f32.gmra.mxu0 %v1149
    %v1288 = vpop.f32.mrf.mxu0
    %v1289 = vadd.f32 %v1107, %v1288
    %v1290 = vpop.f32.mrf.mxu0
    %1291 = vmatprep.mubr.f32.mxu0 0.0
    %1292 = vmatmul.mubr.f32.gmra.mxu0 %v1152
    %v1293 = vpop.f32.mrf.mxu0
    %v1294 = vadd.f32 %v1107, %v1293
    %v1295 = vpop.f32.mrf.mxu0
    %1296 = vmatprep.mubr.f32.mxu0 0.0
    %1297 = vmatmul.mubr.f32.gmra.mxu0 %v1155
    %v1298 = vpop.f32.mrf.mxu0
    %v1299 = vadd.f32 %v1107, %v1298
    %v1300 = vpop.f32.mrf.mxu0
    %1301 = vdwg.mxu0
    %v1302 = vsel %vm694, %v1224, -inf
    %1303 = vmax.xlane.f32.xlu0 %v1302
    %v1304 = vpop.xlane.xlu0 %1303
    %v1305 = vsel %vm694, %v1229, -inf
    %1306 = vmax.xlane.f32.xlu0 %v1305
    %v1307 = vpop.xlane.xlu0 %1306
    %v1308 = vsel %vm694, %v1234, -inf
    %1309 = vmax.xlane.f32.xlu0 %v1308
    %v1310 = vpop.xlane.xlu0 %1309
    %v1311 = vsel %vm694, %v1239, -inf
    %1312 = vmax.xlane.f32.xlu0 %v1311
    %v1313 = vpop.xlane.xlu0 %1312
    %v1314 = vsel %vm694, %v1244, -inf
    %1315 = vmax.xlane.f32.xlu0 %v1314
    %v1316 = vpop.xlane.xlu0 %1315
    %v1317 = vsel %vm694, %v1249, -inf
    %1318 = vmax.xlane.f32.xlu0 %v1317
    %v1319 = vpop.xlane.xlu0 %1318
    %v1320 = vsel %vm694, %v1254, -inf
    %1321 = vmax.xlane.f32.xlu0 %v1320
    %v1322 = vpop.xlane.xlu0 %1321
    %v1323 = vsel %vm694, %v1259, -inf
    %1324 = vmax.xlane.f32.xlu0 %v1323
    %v1325 = vpop.xlane.xlu0 %1324
    %v1326 = vsel %vm694, %v1264, -inf
    %1327 = vmax.xlane.f32.xlu0 %v1326
    %v1328 = vpop.xlane.xlu0 %1327
    %v1329 = vsel %vm694, %v1269, -inf
    %1330 = vmax.xlane.f32.xlu0 %v1329
    %v1331 = vpop.xlane.xlu0 %1330
    %v1332 = vsel %vm694, %v1274, -inf
    %1333 = vmax.xlane.f32.xlu0 %v1332
    %v1334 = vpop.xlane.xlu0 %1333
    %v1335 = vsel %vm694, %v1279, -inf
    %1336 = vmax.xlane.f32.xlu0 %v1335
    %v1337 = vpop.xlane.xlu0 %1336
    %v1338 = vsel %vm694, %v1284, -inf
    %1339 = vmax.xlane.f32.xlu0 %v1338
    %v1340 = vpop.xlane.xlu0 %1339
    %v1341 = vsel %vm694, %v1289, -inf
    %1342 = vmax.xlane.f32.xlu0 %v1341
    %v1343 = vpop.xlane.xlu0 %1342
    %v1344 = vsel %vm694, %v1294, -inf
    %1345 = vmax.xlane.f32.xlu0 %v1344
    %v1346 = vpop.xlane.xlu0 %1345
    %v1347 = vsel %vm694, %v1299, -inf
    %1348 = vmax.xlane.f32.xlu0 %v1347
    %v1349 = vpop.xlane.xlu0 %1348
    %v1350 = vsub.f32 %v1224, %v1304
    %v1351 = vsub.f32 %v1229, %v1307
    %v1352 = vsub.f32 %v1234, %v1310
    %v1353 = vsub.f32 %v1239, %v1313
    %v1354 = vsub.f32 %v1244, %v1316
    %v1355 = vsub.f32 %v1249, %v1319
    %v1356 = vsub.f32 %v1254, %v1322
    %v1357 = vsub.f32 %v1259, %v1325
    %v1358 = vsub.f32 %v1264, %v1328
    %v1359 = vsub.f32 %v1269, %v1331
    %v1360 = vsub.f32 %v1274, %v1334
    %v1361 = vsub.f32 %v1279, %v1337
    %v1362 = vsub.f32 %v1284, %v1340
    %v1363 = vsub.f32 %v1289, %v1343
    %v1364 = vsub.f32 %v1294, %v1346
    %v1365 = vsub.f32 %v1299, %v1349
    %v1366 = vmul.f32 %v1350, 1.442695
    %v1367 = vpow.pop %v1366
    %v1368 = vmul.f32 %v1351, 1.442695
    %v1369 = vpow.pop %v1368
    %v1370 = vmul.f32 %v1352, 1.442695
    %v1371 = vpow.pop %v1370
    %v1372 = vmul.f32 %v1353, 1.442695
    %v1373 = vpow.pop %v1372
    %v1374 = vmul.f32 %v1354, 1.442695
    %v1375 = vpow.pop %v1374
    %v1376 = vmul.f32 %v1355, 1.442695
    %v1377 = vpow.pop %v1376
    %v1378 = vmul.f32 %v1356, 1.442695
    %v1379 = vpow.pop %v1378
    %v1380 = vmul.f32 %v1357, 1.442695
    %v1381 = vpow.pop %v1380
    %v1382 = vmul.f32 %v1358, 1.442695
    %v1383 = vpow.pop %v1382
    %v1384 = vmul.f32 %v1359, 1.442695
    %v1385 = vpow.pop %v1384
    %v1386 = vmul.f32 %v1360, 1.442695
    %v1387 = vpow.pop %v1386
    %v1388 = vmul.f32 %v1361, 1.442695
    %v1389 = vpow.pop %v1388
    %v1390 = vmul.f32 %v1362, 1.442695
    %v1391 = vpow.pop %v1390
    %v1392 = vmul.f32 %v1363, 1.442695
    %v1393 = vpow.pop %v1392
    %v1394 = vmul.f32 %v1364, 1.442695
    %v1395 = vpow.pop %v1394
    %v1396 = vmul.f32 %v1365, 1.442695
    %v1397 = vpow.pop %v1396
    %v1398 = vsel %vm694, %v1367, 0.0
    %1399 = vadd.xlane.f32.xlu0 %v1398
    %v1400 = vpop.xlane.xlu0 %1399
    %v1401 = vsel %vm694, %v1369, 0.0
    %1402 = vadd.xlane.f32.xlu0 %v1401
    %v1403 = vpop.xlane.xlu0 %1402
    %v1404 = vsel %vm694, %v1371, 0.0
    %1405 = vadd.xlane.f32.xlu0 %v1404
    %v1406 = vpop.xlane.xlu0 %1405
    %v1407 = vsel %vm694, %v1373, 0.0
    %1408 = vadd.xlane.f32.xlu0 %v1407
    %v1409 = vpop.xlane.xlu0 %1408
    %v1410 = vsel %vm694, %v1375, 0.0
    %1411 = vadd.xlane.f32.xlu0 %v1410
    %v1412 = vpop.xlane.xlu0 %1411
    %v1413 = vsel %vm694, %v1377, 0.0
    %1414 = vadd.xlane.f32.xlu0 %v1413
    %v1415 = vpop.xlane.xlu0 %1414
    %v1416 = vsel %vm694, %v1379, 0.0
    %1417 = vadd.xlane.f32.xlu0 %v1416
    %v1418 = vpop.xlane.xlu0 %1417
    %v1419 = vsel %vm694, %v1381, 0.0
    %1420 = vadd.xlane.f32.xlu0 %v1419
    %v1421 = vpop.xlane.xlu0 %1420
    %v1422 = vsel %vm694, %v1383, 0.0
    %1423 = vadd.xlane.f32.xlu0 %v1422
    %v1424 = vpop.xlane.xlu0 %1423
    %v1425 = vsel %vm694, %v1385, 0.0
    %1426 = vadd.xlane.f32.xlu0 %v1425
    %v1427 = vpop.xlane.xlu0 %1426
    %v1428 = vsel %vm694, %v1387, 0.0
    %1429 = vadd.xlane.f32.xlu0 %v1428
    %v1430 = vpop.xlane.xlu0 %1429
    %v1431 = vsel %vm694, %v1389, 0.0
    %1432 = vadd.xlane.f32.xlu0 %v1431
    %v1433 = vpop.xlane.xlu0 %1432
    %v1434 = vsel %vm694, %v1391, 0.0
    %1435 = vadd.xlane.f32.xlu0 %v1434
    %v1436 = vpop.xlane.xlu0 %1435
    %v1437 = vsel %vm694, %v1393, 0.0
    %1438 = vadd.xlane.f32.xlu0 %v1437
    %v1439 = vpop.xlane.xlu0 %1438
    %v1440 = vsel %vm694, %v1395, 0.0
    %1441 = vadd.xlane.f32.xlu0 %v1440
    %v1442 = vpop.xlane.xlu0 %1441
    %v1443 = vsel %vm694, %v1397, 0.0
    %1444 = vadd.xlane.f32.xlu0 %v1443
    %v1445 = vpop.xlane.xlu0 %1444
    %v1446 = vrcp.pop %v1400
    %v1447 = vrcp.pop %v1403
    %v1448 = vrcp.pop %v1406
    %v1449 = vrcp.pop %v1409
    %v1450 = vrcp.pop %v1412
    %v1451 = vrcp.pop %v1415
    %v1452 = vrcp.pop %v1418
    %v1453 = vrcp.pop %v1421
    %v1454 = vrcp.pop %v1424
    %v1455 = vrcp.pop %v1427
    %v1456 = vrcp.pop %v1430
    %v1457 = vrcp.pop %v1433
    %v1458 = vrcp.pop %v1436
    %v1459 = vrcp.pop %v1439
    %v1460 = vrcp.pop %v1442
    %v1461 = vrcp.pop %v1445
    %v1462 = vmul.f32 %v1367, %v1446
    %v1463 = vmul.f32 %v1369, %v1447
    %v1464 = vmul.f32 %v1371, %v1448
    %v1465 = vmul.f32 %v1373, %v1449
    %v1466 = vmul.f32 %v1375, %v1450
    %v1467 = vmul.f32 %v1377, %v1451
    %v1468 = vmul.f32 %v1379, %v1452
    %v1469 = vmul.f32 %v1381, %v1453
    %v1470 = vmul.f32 %v1383, %v1454
    %v1471 = vmul.f32 %v1385, %v1455
    %v1472 = vmul.f32 %v1387, %v1456
    %v1473 = vmul.f32 %v1389, %v1457
    %v1474 = vmul.f32 %v1391, %v1458
    %v1475 = vmul.f32 %v1393, %v1459
    %v1476 = vmul.f32 %v1395, %v1460
    %v1477 = vmul.f32 %v1397, %v1461
    %1478 = vst.msk [vmem:[#allocation2] sm:$0xff] %vm694, %v1462
    %1479 = vst.msk [vmem:[#allocation2 + $0x8] sm:$0xff] %vm694, %v1463
    %1482 = vrot.lane.b32.xlu0 %v1464, 16
    %v1483 = vpop.permute.xlu0 %1482
    %1484 = vrot.lane.b32.xlu0 %v1465, 16
    %v1485 = vpop.permute.xlu0 %1484
    %vm1488 = vcmask 261248
    %1489 = vst.msk [vmem:[#allocation2] sm:$0xff] %vm1488, %v1483
    %1490 = vst.msk [vmem:[#allocation2 + $0x8] sm:$0xff] %vm1488, %v1485
    %1493 = vrot.lane.b32.xlu0 %v1466, 32
    %v1494 = vpop.permute.xlu0 %1493
    %1495 = vrot.lane.b32.xlu0 %v1467, 32
    %v1496 = vpop.permute.xlu0 %1495
    %vm1499 = vcmask 392448
    %1500 = vst.msk [vmem:[#allocation2] sm:$0xff] %vm1499, %v1494
    %1501 = vst.msk [vmem:[#allocation2 + $0x8] sm:$0xff] %vm1499, %v1496
    %1504 = vrot.lane.b32.xlu0 %v1468, 48
    %v1505 = vpop.permute.xlu0 %1504
    %1506 = vrot.lane.b32.xlu0 %v1469, 48
    %v1507 = vpop.permute.xlu0 %1506
    %vm1510 = vcmask 523648
    %1511 = vst.msk [vmem:[#allocation2] sm:$0xff] %vm1510, %v1505
    %1512 = vst.msk [vmem:[#allocation2 + $0x8] sm:$0xff] %vm1510, %v1507
    %1515 = vrot.lane.b32.xlu0 %v1470, 64
    %v1516 = vpop.permute.xlu0 %1515
    %1517 = vrot.lane.b32.xlu0 %v1471, 64
    %v1518 = vpop.permute.xlu0 %1517
    %vm1521 = vcmask 654848
    %1522 = vst.msk [vmem:[#allocation2] sm:$0xff] %vm1521, %v1516
    %1523 = vst.msk [vmem:[#allocation2 + $0x8] sm:$0xff] %vm1521, %v1518
    %1526 = vrot.lane.b32.xlu0 %v1472, 80
    %v1527 = vpop.permute.xlu0 %1526
    %1528 = vrot.lane.b32.xlu0 %v1473, 80
    %v1529 = vpop.permute.xlu0 %1528
    %vm1532 = vcmask 786048
    %1533 = vst.msk [vmem:[#allocation2] sm:$0xff] %vm1532, %v1527
    %1534 = vst.msk [vmem:[#allocation2 + $0x8] sm:$0xff] %vm1532, %v1529
    %1537 = vrot.lane.b32.xlu0 %v1474, 96
    %v1538 = vpop.permute.xlu0 %1537
    %1539 = vrot.lane.b32.xlu0 %v1475, 96
    %v1540 = vpop.permute.xlu0 %1539
    %vm1543 = vcmask 917248
    %1544 = vst.msk [vmem:[#allocation2] sm:$0xff] %vm1543, %v1538
    %1545 = vst.msk [vmem:[#allocation2 + $0x8] sm:$0xff] %vm1543, %v1540
    %1548 = vrot.lane.b32.xlu0 %v1476, 112
    %v1549 = vpop.permute.xlu0 %1548
    %1550 = vrot.lane.b32.xlu0 %v1477, 112
    %v1551 = vpop.permute.xlu0 %1550
    %vm1554 = vcmask 1048448
    %1555 = vst.msk [vmem:[#allocation2] sm:$0xff] %vm1554, %v1549
    %1556 = vst.msk [vmem:[#allocation2 + $0x8] sm:$0xff] %vm1554, %v1551
    %v1557 = vld [vmem:[%s2] sm:$0xff]
    %v1558 = vld [vmem:[%s2 + $0x8] sm:$0xff]
    %v1559 = vld [vmem:[%s2 + $0x10] sm:$0xff]
    %v1560 = vld [vmem:[%s2 + $0x18] sm:$0xff]
    %v1561 = vld [vmem:[%s2 + $0x20] sm:$0xff]
    %v1562 = vld [vmem:[%s2 + $0x28] sm:$0xff]
    %v1563 = vld [vmem:[%s2 + $0x30] sm:$0xff]
    %v1564 = vld [vmem:[%s2 + $0x38] sm:$0xff]
    %v1565 = vld [vmem:[%s2 + $0x40] sm:$0xff]
    %v1566 = vld [vmem:[%s2 + $0x48] sm:$0xff]
    %v1567 = vld [vmem:[%s2 + $0x50] sm:$0xff]
    %v1568 = vld [vmem:[%s2 + $0x58] sm:$0xff]
    %v1569 = vld [vmem:[%s2 + $0x60] sm:$0xff]
    %v1570 = vld [vmem:[%s2 + $0x68] sm:$0xff]
    %v1571 = vld [vmem:[%s2 + $0x70] sm:$0xff]
    %v1572 = vld [vmem:[%s2 + $0x78] sm:$0xff]
    %v1573 = vadd.f32 %v1462, 1e-06
    %v1574 = vadd.f32 %v1463, 1e-06
    %v1575 = vadd.f32 %v1464, 1e-06
    %v1576 = vadd.f32 %v1465, 1e-06
    %v1577 = vadd.f32 %v1466, 1e-06
    %v1578 = vadd.f32 %v1467, 1e-06
    %v1579 = vadd.f32 %v1468, 1e-06
    %v1580 = vadd.f32 %v1469, 1e-06
    %v1581 = vadd.f32 %v1470, 1e-06
    %v1582 = vadd.f32 %v1471, 1e-06
    %v1583 = vadd.f32 %v1472, 1e-06
    %v1584 = vadd.f32 %v1473, 1e-06
    %v1585 = vadd.f32 %v1474, 1e-06
    %v1586 = vadd.f32 %v1475, 1e-06
    %v1587 = vadd.f32 %v1476, 1e-06
    %v1588 = vadd.f32 %v1477, 1e-06
    %v1589 = vlog2.pop %v1573
    %v1590 = vmul.f32 %v1589, 0.6931472
    %v1591 = vlog2.pop %v1574
    %v1592 = vmul.f32 %v1591, 0.6931472
    %v1593 = vlog2.pop %v1575
    %v1594 = vmul.f32 %v1593, 0.6931472
    %v1595 = vlog2.pop %v1576
    %v1596 = vmul.f32 %v1595, 0.6931472
    %v1597 = vlog2.pop %v1577
    %v1598 = vmul.f32 %v1597, 0.6931472
    %v1599 = vlog2.pop %v1578
    %v1600 = vmul.f32 %v1599, 0.6931472
    %v1601 = vlog2.pop %v1579
    %v1602 = vmul.f32 %v1601, 0.6931472
    %v1603 = vlog2.pop %v1580
    %v1604 = vmul.f32 %v1603, 0.6931472
    %v1605 = vlog2.pop %v1581
    %v1606 = vmul.f32 %v1605, 0.6931472
    %v1607 = vlog2.pop %v1582
    %v1608 = vmul.f32 %v1607, 0.6931472
    %v1609 = vlog2.pop %v1583
    %v1610 = vmul.f32 %v1609, 0.6931472
    %v1611 = vlog2.pop %v1584
    %v1612 = vmul.f32 %v1611, 0.6931472
    %v1613 = vlog2.pop %v1585
    %v1614 = vmul.f32 %v1613, 0.6931472
    %v1615 = vlog2.pop %v1586
    %v1616 = vmul.f32 %v1615, 0.6931472
    %v1617 = vlog2.pop %v1587
    %v1618 = vmul.f32 %v1617, 0.6931472
    %v1619 = vlog2.pop %v1588
    %v1620 = vmul.f32 %v1619, 0.6931472
    %v1621 = vmul.f32 %v1557, %v1590
    %v1622 = vmul.f32 %v1558, %v1592
    %v1623 = vmul.f32 %v1559, %v1594
    %v1624 = vmul.f32 %v1560, %v1596
    %v1625 = vmul.f32 %v1561, %v1598
    %v1626 = vmul.f32 %v1562, %v1600
    %v1627 = vmul.f32 %v1563, %v1602
    %v1628 = vmul.f32 %v1564, %v1604
    %v1629 = vmul.f32 %v1565, %v1606
    %v1630 = vmul.f32 %v1566, %v1608
    %v1631 = vmul.f32 %v1567, %v1610
    %v1632 = vmul.f32 %v1568, %v1612
    %v1633 = vmul.f32 %v1569, %v1614
    %v1634 = vmul.f32 %v1570, %v1616
    %v1635 = vmul.f32 %v1571, %v1618
    %v1636 = vmul.f32 %v1572, %v1620
    %v1637 = vsel %vm694, %v1621, 0.0
    %v1638 = vsel %vm694, %v1622, 0.0
    %v1639 = vadd.f32 %v1637, %v1638
    %v1640 = vsel %vm694, %v1623, 0.0
    %v1641 = vadd.f32 %v1639, %v1640
    %v1642 = vsel %vm694, %v1624, 0.0
    %v1643 = vadd.f32 %v1641, %v1642
    %v1644 = vsel %vm694, %v1625, 0.0
    %v1645 = vadd.f32 %v1643, %v1644
    %v1646 = vsel %vm694, %v1626, 0.0
    %v1647 = vadd.f32 %v1645, %v1646
    %v1648 = vsel %vm694, %v1627, 0.0
    %v1649 = vadd.f32 %v1647, %v1648
    %v1650 = vsel %vm694, %v1628, 0.0
    %v1651 = vadd.f32 %v1649, %v1650
    %v1652 = vsel %vm694, %v1629, 0.0
    %v1653 = vadd.f32 %v1651, %v1652
    %v1654 = vsel %vm694, %v1630, 0.0
    %v1655 = vadd.f32 %v1653, %v1654
    %v1656 = vsel %vm694, %v1631, 0.0
    %v1657 = vadd.f32 %v1655, %v1656
    %v1658 = vsel %vm694, %v1632, 0.0
    %v1659 = vadd.f32 %v1657, %v1658
    %v1660 = vsel %vm694, %v1633, 0.0
    %v1661 = vadd.f32 %v1659, %v1660
    %v1662 = vsel %vm694, %v1634, 0.0
    %v1663 = vadd.f32 %v1661, %v1662
    %v1664 = vsel %vm694, %v1635, 0.0
    %v1665 = vadd.f32 %v1663, %v1664
    %v1666 = vsel %vm694, %v1636, 0.0
    %v1667 = vadd.f32 %v1665, %v1666
    %1668 = vadd.xlane.f32.xlu0 %v1667
    %v1669 = vpop.xlane.xlu0 %1668
    %v1670 = vrot.slane %v1669, 4
    %v1671 = vadd.f32 %v1669, %v1670
    %v1672 = vrot.slane %v1671, 2
    %v1673 = vadd.f32 %v1671, %v1672
    %v1674 = vrot.slane %v1673, 1
    %v1675 = vadd.f32 %v1673, %v1674
    %s1676 = vtos %v1675
    %v1677 = vstv %s1676
    %v1678 = vsub.f32 0.0, %v1677
    %vm1679 = vcmask 0
    %1680 = vst.msk [vmem:[#allocation4] sm:$0x1] %vm1679, %v1678
    // Predicated region
    $region58: #{tpu_custom_call.1} parent=1 // pred_check
      _
    $region59: #{tpu_custom_call.1} parent=1 // pred_check_branch
      %1682 = sbr.rel (0) target = $region61
    $region60: #{tpu_custom_call.1} parent=1 // pred_region
      %s1684 = ssub.s32 256, 256
      %1685 = vsyncadd [#allocation3], %s1684
      %s1686 = sshll.u32 [#allocation2], 4
      %s1687 = int_to_ptr.vmem [resolvable:$true] %s1686
      %1692 = dma.vmem_to_hbm [thread:$0]  %s1687, 256, %s14, [#allocation3], 128, 128, 8
    $region61: #{tpu_custom_call.1} parent=1 // pred_fallthru
      _
    // Predicated region
    $region62: #{tpu_custom_call.1} parent=1 // pred_check
      _
    $region63: #{tpu_custom_call.1} parent=1 // pred_check_branch
      %1694 = sbr.rel (0) target = $region65
    $region64: #{tpu_custom_call.1} parent=1 // pred_region
      %s1696 = ssub.s32 16, 16
      %1697 = vsyncadd [#allocation5], %s1696
      %s1699 = sshll.u32 [#allocation4], 4
      %s1700 = int_to_ptr.vmem [resolvable:$true] %s1699
      %1702 = dma.vmem_to_hbm [thread:$0]  %s1700, 16, %s15, [#allocation5]
    $region65: #{tpu_custom_call.1} parent=1 // pred_fallthru
      _
    // Predicated region
    $region66: #{tpu_custom_call.1} parent=1 // pred_check
      _
    $region67: #{tpu_custom_call.1} parent=1 // pred_check_branch
      %1704 = sbr.rel (0) target = $region69
    $region68: #{tpu_custom_call.1} parent=1 // pred_region
      %1705 = dma.done [#allocation3], 256
    $region69: #{tpu_custom_call.1} parent=1 // pred_fallthru
      _
    // Predicated region
    $region70: #{tpu_custom_call.1} parent=1 // pred_check
      _
    $region71: #{tpu_custom_call.1} parent=1 // pred_check_branch
      %1707 = sbr.rel (0) target = $region73
    $region72: #{tpu_custom_call.1} parent=1 // pred_region
      %1708 = dma.done [#allocation5], 16
    $region73: #{tpu_custom_call.1} parent=1 // pred_fallthru
      _
    %1709 = vsyncpa [#allocation3], 1
    %1710 = vsyncpa [#allocation5], 1

</llo_original>
